<compile_context>
chip_gen: v5e
topology: v5e:2x2
jax: 0.10.0
libtpu: 0.0.40
codegen_flags: <defaults>
</compile_context>

<pallas_src>
import functools
import numpy as np
import jax
import jax.numpy as jnp
from jax.experimental import pallas as pl
from jax.experimental.pallas import tpu as pltpu

EPS = 1e-5


# ---------------------------------------------------------------------------
# weight normalizations (match complextorch helpers exactly)
# ---------------------------------------------------------------------------
def _normalize_weights(w):
    return w / jnp.sum(w ** 2)


def _normalize_weights_squared(w):
    return w ** 2 / jnp.sum(w ** 2)


def _normalize_rows(w):
    return w ** 2 / jnp.sum(w ** 2, axis=1, keepdims=True)


# ---------------------------------------------------------------------------
# im2col / col2im glue (pure-JAX, matches nn.Unfold / nn.Fold).  Used by the
# reference path and -- on tiny weight-only arrays -- to build coverage maps.
# ---------------------------------------------------------------------------
def _unfold(x, kh, kw, sh, sw, ph, pw):
    B, C, H, W = x.shape
    xp = jnp.pad(x, ((0, 0), (0, 0), (ph, ph), (pw, pw)))
    oH = (H + 2 * ph - kh) // sh + 1
    oW = (W + 2 * pw - kw) // sw + 1
    cols = []
    for dh in range(kh):
        for dw in range(kw):
            cols.append(xp[:, :, dh:dh + (oH - 1) * sh + 1:sh,
                               dw:dw + (oW - 1) * sw + 1:sw])
    patches = jnp.stack(cols, axis=2)                       # (B, C, K, oH, oW)
    return patches.reshape(B, C * kh * kw, oH * oW), (oH, oW)


def _fold(cols, H, W, C, kh, kw, sh, sw, ph, pw):
    B = cols.shape[0]
    oH = (H + 2 * ph - kh) // sh + 1
    oW = (W + 2 * pw - kw) // sw + 1
    cols = cols.reshape(B, C, kh, kw, oH, oW)
    out = jnp.zeros((B, C, H + 2 * ph, W + 2 * pw), cols.dtype)
    for dh in range(kh):
        for dw in range(kw):
            out = out.at[:, :, dh:dh + (oH - 1) * sh + 1:sh,
                             dw:dw + (oW - 1) * sw + 1:sw].add(cols[:, :, dh, dw])
    return out[:, :, ph:ph + H, pw:pw + W]


# ---------------------------------------------------------------------------
# chip-aware VMEM budget / batch-block picking
# ---------------------------------------------------------------------------
def _chip_info():
    kind = ""
    try:
        kind = str(getattr(jax.devices()[0], "device_kind", "") or "").lower()
    except Exception:
        pass
    is_v7 = ("v7" in kind) or ("tpu7" in kind)
    vmem_cap = 0
    try:
        vmem_cap = int(getattr(pltpu.get_tpu_info(), "vmem_capacity_bytes", 0))
    except Exception:
        vmem_cap = 0
    if vmem_cap <= 0:
        vmem_cap = (64 if is_v7 else 128) * 1024 * 1024
    return vmem_cap, is_v7


def _pick_bblk(B, per_sample_bytes, budget_bytes, prefer_two_steps):
    """Largest batch block whose double-buffered streams fit the budget."""
    max_b = max(1, budget_bytes // max(1, 2 * per_sample_bytes))
    bblk = int(min(B, max_b, 8))                 # cap static unroll / compile time
    if prefer_two_steps and bblk >= B and B > 1:
        bblk = (B + 1) // 2                      # v7x: keep >= 2 steps for 2 TCs
    while B % bblk:
        bblk -= 1
    return max(1, bblk)


# ---------------------------------------------------------------------------
# the fused Pallas kernel
# ---------------------------------------------------------------------------
def _wfm_kernel(mag_ref, ang_ref, cnt_ref, smag_ref, wang_ref, w_ref,
                or_ref, oi_ref, *, bblk, cout, kh, kw, wp, oh, eps):
    # Fully fused per batch block:
    #   stage A   : m = cnt*mag + smag ; a = wang*ang                 (VPU)
    #   helper    : im2col in VMEM via lane-shifted slices, ONE block-diagonal
    #               MXU matmul for both (mag, ang) branches, exp on the mag half
    #   from_polar: real/imag = out_mag * cos/sin(out_ang)            (EUP)
    w = w_ref[...]                                # (2*Cout, 2*K*C), resident
    cnt = cnt_ref[...]                            # (C, HWp2)
    smag = smag_ref[...]
    wang = wang_ref[...]
    lw = oh * wp
    for bi in range(bblk):                        # static unroll over batch block
        m = cnt * mag_ref[bi].astype(jnp.float32) + smag      # (C, HWp2)
        a = wang * ang_ref[bi].astype(jnp.float32)
        lm = jnp.log(m + eps)
        pieces = []
        for src in (lm, a):                       # mag rows first, then ang rows
            for dh in range(kh):
                for dw in range(kw):
                    s = dh * wp + dw
                    pieces.append(src[:, s:s + lw])            # flattened window
        cols = jnp.concatenate(pieces, axis=0)    # (2*K*C, oh*wp) im2col in VMEM
        res = jnp.dot(w, cols, preferred_element_type=jnp.float32)  # (2*Cout, oh*wp)
        om = jnp.exp(res[:cout, :])
        oa = res[cout:, :]
        or_ref[bi] = om * jnp.cos(oa)
        oi_ref[bi] = om * jnp.sin(oa)


def _wfm_pallas(mag, ang, params, kh, kw, ph, pw, eps, act_dtype=jnp.float32):
    """Optimized path for stride == (1, 1).  Returns None if a single sample
    does not fit the whole-image VMEM block budget (caller falls back)."""
    B, C, H, W = mag.shape
    K = kh * kw
    Cout = params["weight_matrix_ang2"].shape[0]
    Hp, Wp = H + 2 * ph, W + 2 * pw
    oH, oW = Hp - kh + 1, Wp - kw + 1
    if oH < 1 or oW < 1:
        return None
    L = oH * oW
    Lw = oH * Wp                                  # lane-dense output (junk cols sliced on host)
    HWp = Hp * Wp
    HWp2 = HWp + (kw - 1)                         # flat tail pad so every window slice is in-bounds

    # ---- analytic collapse of the outer (Stage A) unfold -> weight -> fold ----
    wms = _normalize_weights_squared(params["weight_matrix_mag"]).reshape(1, C * K, 1)
    wn = _normalize_weights(params["weight_matrix_ang"]).reshape(1, C * K, 1)
    cnt = _fold(jnp.ones((1, K, L), jnp.float32), H, W, 1, kh, kw, 1, 1, ph, pw)[0, 0]      # (H, W)
    smag = _fold(jnp.broadcast_to(wms, (1, C * K, L)), H, W, C, kh, kw, 1, 1, ph, pw)[0]    # (C, H, W)
    wang = _fold(jnp.broadcast_to(wn, (1, C * K, L)), H, W, C, kh, kw, 1, 1, ph, pw)[0]     # (C, H, W)

    def prep_map(m):                              # (H,W) or (C,H,W) -> (C, HWp2) f32
        if m.ndim == 2:
            m = jnp.broadcast_to(m[None], (C, H, W))
        m = jnp.pad(m, ((0, 0), (ph, ph), (pw, pw)))
        return jnp.pad(m.reshape(C, HWp), ((0, 0), (0, kw - 1))).astype(jnp.float32)

    def prep_act(t):                              # (B,C,H,W) -> (B, C, HWp2)
        t = jnp.pad(t, ((0, 0), (0, 0), (ph, ph), (pw, pw)))
        return jnp.pad(t.reshape(B, C, HWp),
                       ((0, 0), (0, 0), (0, kw - 1))).astype(act_dtype)

    cnt_f, smag_f, wang_f = prep_map(cnt), prep_map(smag), prep_map(wang)
    mag_f, ang_f = prep_act(mag), prep_act(ang)

    # ---- helper-layer weights, (k, c)-ordered to match the in-kernel im2col ----
    wmm1 = _normalize_rows(params["weight_matrix_ang1"])          # (C, K)
    wmm2 = _normalize_rows(params["weight_matrix_ang2"])          # (Cout, C)
    wma1 = _normalize_weights_squared(params["weight_matrix_ang1"])
    wma2 = _normalize_weights_squared(params["weight_matrix_ang2"])
    w_mag = jnp.einsum("oc,ck->okc", wmm2, wmm1).reshape(Cout, K * C)
    w_ang = jnp.einsum("oc,ck->okc", wma2, wma1).reshape(Cout, K * C)
    w_blk = jnp.zeros((2 * Cout, 2 * K * C), jnp.float32)
    w_blk = w_blk.at[:Cout, :K * C].set(w_mag)
    w_blk = w_blk.at[Cout:, K * C:].set(w_ang)

    # ---- chip-aware block sizing ----
    vmem_cap, is_v7 = _chip_info()
    vmem_limit = int(min(vmem_cap // 2, (32 if is_v7 else 64) * 1024 * 1024))
    stream_budget = vmem_limit // 2
    itemsize = jnp.dtype(act_dtype).itemsize
    per_sample = (2 * C * HWp2 * itemsize                 # streamed mag/ang block
                  + 2 * Cout * Lw * 4                     # streamed outputs
                  + (3 * C * HWp2 + 2 * (2 * K * C) * Lw) * 4)   # in-kernel temporaries
    if 2 * per_sample > stream_budget:
        # TODO(synk): halo row-tiling for images too large for whole-image VMEM blocks.
        return None
    bblk = _pick_bblk(B, per_sample, stream_budget, prefer_two_steps=is_v7)

    kernel = functools.partial(_wfm_kernel, bblk=bblk, cout=Cout,
                               kh=kh, kw=kw, wp=Wp, oh=oH, eps=float(eps))
    act_spec = pl.BlockSpec((bblk, C, HWp2), lambda i: (i, 0, 0))
    map_spec = pl.BlockSpec((C, HWp2), lambda i: (0, 0))
    w_spec = pl.BlockSpec((2 * Cout, 2 * K * C), lambda i: (0, 0))
    out_spec = pl.BlockSpec((bblk, Cout, Lw), lambda i: (i, 0, 0))

    out_r, out_i = pl.pallas_call(
        kernel,
        out_shape=(jax.ShapeDtypeStruct((B, Cout, Lw), jnp.float32),
                   jax.ShapeDtypeStruct((B, Cout, Lw), jnp.float32)),
        grid=(B // bblk,),
        in_specs=[act_spec, act_spec, map_spec, map_spec, map_spec, w_spec],
        out_specs=(out_spec, out_spec),
        compiler_params=pltpu.CompilerParams(
            dimension_semantics=("parallel",),
            vmem_limit_bytes=vmem_limit),
    )(mag_f, ang_f, cnt_f, smag_f, wang_f, w_blk)

    out_r = out_r.reshape(B, Cout, oH, Wp)[:, :, :, :oW]
    out_i = out_i.reshape(B, Cout, oH, Wp)[:, :, :, :oW]
    return jax.lax.complex(out_r, out_i)


# ---------------------------------------------------------------------------
# pure-JAX reference (literal unfold -> weight -> fold -> helper), also the
# fallback for stride != (1, 1) / oversize images.
# ---------------------------------------------------------------------------
def _reference(x, params, kernel_size, stride, padding, eps):
    B, C, H, W = x.shape
    kh, kw = kernel_size
    sh, sw = stride
    ph, pw = padding
    K = kh * kw
    CK = C * K
    Cout = params["weight_matrix_ang2"].shape[0]

    mag = jnp.abs(x).astype(jnp.float32)
    ang = jnp.angle(x).astype(jnp.float32)

    pm, (oH, oW) = _unfold(mag, kh, kw, sh, sw, ph, pw)          # (B, C*K, L)
    pa, _ = _unfold(ang, kh, kw, sh, sw, ph, pw)
    wms = _normalize_weights_squared(params["weight_matrix_mag"]).reshape(1, CK, 1)
    wn = _normalize_weights(params["weight_matrix_ang"]).reshape(1, CK, 1)
    mag_fold = _fold(pm + wms, H, W, C, kh, kw, sh, sw, ph, pw)  # (B, C, H, W)
    ang_fold = _fold(pa * wn, H, W, C, kh, kw, sh, sw, ph, pw)

    um, _ = _unfold(mag_fold, kh, kw, sh, sw, ph, pw)
    ua, _ = _unfold(ang_fold, kh, kw, sh, sw, ph, pw)
    lm = jnp.log(um + eps)

    wmm1 = _normalize_rows(params["weight_matrix_ang1"])
    wmm2 = _normalize_rows(params["weight_matrix_ang2"])
    w_mag = (wmm2[:, :, None] * wmm1[None, :, :]).reshape(Cout, CK)
    wma1 = _normalize_weights_squared(params["weight_matrix_ang1"])
    wma2 = _normalize_weights_squared(params["weight_matrix_ang2"])
    w_ang = (wma2[:, :, None] * wma1[None, :, :]).reshape(Cout, CK)

    om = jnp.exp(jnp.einsum("oc,bcl->bol", w_mag, lm,
                            precision=jax.lax.Precision.HIGHEST))
    oa = jnp.einsum("oc,bcl->bol", w_ang, ua,
                    precision=jax.lax.Precision.HIGHEST)
    out_mag = om.reshape(B, Cout, oH, oW)
    out_ang = oa.reshape(B, Cout, oH, oW)
    return jax.lax.complex(out_mag * jnp.cos(out_ang),
                           out_mag * jnp.sin(out_ang))


# ---------------------------------------------------------------------------
# parameters + forward pass
# ---------------------------------------------------------------------------
def init_params(key, in_channels, out_channels, kernel_size):
    K = int(np.prod(kernel_size))                 # torch.rand -> uniform [0, 1)
    k0, k1, k2, k3 = jax.random.split(key, 4)
    return {
        "weight_matrix_mag":  jax.random.uniform(k0, (in_channels, K), jnp.float32),
        "weight_matrix_ang":  jax.random.uniform(k1, (in_channels, K), jnp.float32),
        "weight_matrix_ang1": jax.random.uniform(k2, (in_channels, K), jnp.float32),
        "weight_matrix_ang2": jax.random.uniform(k3, (out_channels, in_channels),
                                                 jnp.float32),
    }


def wfm_conv2d(x, params, kernel_size, stride=(1, 1), padding=(0, 0), eps=EPS,
               use_pallas=True, act_dtype=jnp.float32):
    kh, kw = kernel_size
    sh, sw = stride
    ph, pw = padding
    if use_pallas and (sh, sw) == (1, 1):
        mag = jnp.abs(x).astype(jnp.float32)
        ang = jnp.angle(x).astype(jnp.float32)
        out = _wfm_pallas(mag, ang, params, kh, kw, ph, pw, eps, act_dtype)
        if out is not None:
            return out
    # TODO(synk): Pallas fast path currently requires stride == (1, 1) (the module
    # default); other strides / oversize images use the fused XLA reference below.
    return _reference(x, params, kernel_size, stride, padding, eps)


if __name__ == "__main__":
    key = jax.random.PRNGKey(0)
    k_x, k_p = jax.random.split(key)
    B, C_in, C_out, H, W = 2, 4, 8, 16, 16
    kernel_size, stride, padding = (3, 3), (1, 1), (0, 0)

    kr, ki = jax.random.split(k_x)
    x = jax.lax.complex(
        jax.random.uniform(kr, (B, C_in, H, W), jnp.float32, -1.0, 1.0),
        jax.random.uniform(ki, (B, C_in, H, W), jnp.float32, -1.0, 1.0))

    params = init_params(k_p, C_in, C_out, kernel_size)

    fwd = jax.jit(functools.partial(wfm_conv2d, kernel_size=kernel_size,
                                    stride=stride, padding=padding,
                                    use_pallas=True))
    out = jax.block_until_ready(fwd(x, params))

    ref_fn = jax.jit(functools.partial(wfm_conv2d, kernel_size=kernel_size,
                                       stride=stride, padding=padding,
                                       use_pallas=False))
    ref = jax.block_until_ready(ref_fn(x, params))

    assert out.shape == (B, C_out, H - 2, W - 2), out.shape
    np.testing.assert_allclose(np.asarray(out), np.asarray(ref),
                               rtol=5e-2, atol=5e-3)
    print("KERNEL_OK")
</pallas_src>

<mosaic_0001>
module attributes {stable_mosaic.version = 11 : i64} {
  func.func @_wfm_kernel(%arg0: i32, %arg1: memref<2x4x258xf32, #tpu.memory_space<vmem>>, %arg2: memref<2x4x258xf32, #tpu.memory_space<vmem>>, %arg3: memref<4x258xf32, #tpu.memory_space<vmem>>, %arg4: memref<4x258xf32, #tpu.memory_space<vmem>>, %arg5: memref<4x258xf32, #tpu.memory_space<vmem>>, %arg6: memref<16x72xf32, #tpu.memory_space<vmem>>, %arg7: memref<2x8x224xf32, #tpu.memory_space<vmem>>, %arg8: memref<2x8x224xf32, #tpu.memory_space<vmem>>) attributes {dimension_semantics = [#tpu.dimension_semantics<parallel>], iteration_bounds = array<i64: 1>, scalar_prefetch = 0 : i64, scratch_operands = 0 : i64, tpu.core_type = #tpu.core_type<tc>, window_params = [{transform_indices = @transform_0, window_bounds = array<i64: 2, 4, 258>}, {transform_indices = @transform_1, window_bounds = array<i64: 2, 4, 258>}, {pipeline_mode = #tpu.pipeline_mode<synchronous>, transform_indices = @transform_2, window_bounds = array<i64: 4, 258>}, {pipeline_mode = #tpu.pipeline_mode<synchronous>, transform_indices = @transform_3, window_bounds = array<i64: 4, 258>}, {pipeline_mode = #tpu.pipeline_mode<synchronous>, transform_indices = @transform_4, window_bounds = array<i64: 4, 258>}, {pipeline_mode = #tpu.pipeline_mode<synchronous>, transform_indices = @transform_5, window_bounds = array<i64: 16, 72>}, {transform_indices = @transform_6, window_bounds = array<i64: 2, 8, 224>}, {transform_indices = @transform_7, window_bounds = array<i64: 2, 8, 224>}]} {
    %c0 = arith.constant 0 : index
    %c0_0 = arith.constant 0 : index
    %0 = vector.load %arg6[%c0, %c0_0] : memref<16x72xf32, #tpu.memory_space<vmem>>, vector<16x72xf32>
    %c0_1 = arith.constant 0 : index
    %c0_2 = arith.constant 0 : index
    %1 = vector.load %arg3[%c0_1, %c0_2] : memref<4x258xf32, #tpu.memory_space<vmem>>, vector<4x258xf32>
    %c0_3 = arith.constant 0 : index
    %c0_4 = arith.constant 0 : index
    %2 = vector.load %arg4[%c0_3, %c0_4] : memref<4x258xf32, #tpu.memory_space<vmem>>, vector<4x258xf32>
    %c0_5 = arith.constant 0 : index
    %c0_6 = arith.constant 0 : index
    %3 = vector.load %arg5[%c0_5, %c0_6] : memref<4x258xf32, #tpu.memory_space<vmem>>, vector<4x258xf32>
    %c0_7 = arith.constant 0 : index
    %c0_8 = arith.constant 0 : index
    %c0_9 = arith.constant 0 : index
    %4 = vector.load %arg1[%c0_7, %c0_8, %c0_9] : memref<2x4x258xf32, #tpu.memory_space<vmem>>, vector<1x4x258xf32>
    %5 = vector.shape_cast %4 : vector<1x4x258xf32> to vector<4x258xf32>
    %6 = arith.mulf %1, %5 : vector<4x258xf32>
    %7 = arith.addf %6, %2 : vector<4x258xf32>
    %c0_10 = arith.constant 0 : index
    %c0_11 = arith.constant 0 : index
    %c0_12 = arith.constant 0 : index
    %8 = vector.load %arg2[%c0_10, %c0_11, %c0_12] : memref<2x4x258xf32, #tpu.memory_space<vmem>>, vector<1x4x258xf32>
    %9 = vector.shape_cast %8 : vector<1x4x258xf32> to vector<4x258xf32>
    %10 = arith.mulf %3, %9 : vector<4x258xf32>
    %cst = arith.constant 9.99999974E-6 : f32
    %11 = vector.broadcast %cst : f32 to vector<4x258xf32>
    %12 = arith.addf %7, %11 : vector<4x258xf32>
    %13 = math.log %12 : vector<4x258xf32>
    %14 = vector.extract_strided_slice %13 {offsets = [0, 0], sizes = [4, 224], strides = [1, 1]} : vector<4x258xf32> to vector<4x224xf32>
    %15 = vector.extract_strided_slice %13 {offsets = [0, 1], sizes = [4, 224], strides = [1, 1]} : vector<4x258xf32> to vector<4x224xf32>
    %16 = vector.extract_strided_slice %13 {offsets = [0, 2], sizes = [4, 224], strides = [1, 1]} : vector<4x258xf32> to vector<4x224xf32>
    %17 = vector.extract_strided_slice %13 {offsets = [0, 16], sizes = [4, 224], strides = [1, 1]} : vector<4x258xf32> to vector<4x224xf32>
    %18 = vector.extract_strided_slice %13 {offsets = [0, 17], sizes = [4, 224], strides = [1, 1]} : vector<4x258xf32> to vector<4x224xf32>
    %19 = vector.extract_strided_slice %13 {offsets = [0, 18], sizes = [4, 224], strides = [1, 1]} : vector<4x258xf32> to vector<4x224xf32>
    %20 = vector.extract_strided_slice %13 {offsets = [0, 32], sizes = [4, 224], strides = [1, 1]} : vector<4x258xf32> to vector<4x224xf32>
    %21 = vector.extract_strided_slice %13 {offsets = [0, 33], sizes = [4, 224], strides = [1, 1]} : vector<4x258xf32> to vector<4x224xf32>
    %22 = vector.extract_strided_slice %13 {offsets = [0, 34], sizes = [4, 224], strides = [1, 1]} : vector<4x258xf32> to vector<4x224xf32>
    %23 = vector.extract_strided_slice %10 {offsets = [0, 0], sizes = [4, 224], strides = [1, 1]} : vector<4x258xf32> to vector<4x224xf32>
    %24 = vector.extract_strided_slice %10 {offsets = [0, 1], sizes = [4, 224], strides = [1, 1]} : vector<4x258xf32> to vector<4x224xf32>
    %25 = vector.extract_strided_slice %10 {offsets = [0, 2], sizes = [4, 224], strides = [1, 1]} : vector<4x258xf32> to vector<4x224xf32>
    %26 = vector.extract_strided_slice %10 {offsets = [0, 16], sizes = [4, 224], strides = [1, 1]} : vector<4x258xf32> to vector<4x224xf32>
    %27 = vector.extract_strided_slice %10 {offsets = [0, 17], sizes = [4, 224], strides = [1, 1]} : vector<4x258xf32> to vector<4x224xf32>
    %28 = vector.extract_strided_slice %10 {offsets = [0, 18], sizes = [4, 224], strides = [1, 1]} : vector<4x258xf32> to vector<4x224xf32>
    %29 = vector.extract_strided_slice %10 {offsets = [0, 32], sizes = [4, 224], strides = [1, 1]} : vector<4x258xf32> to vector<4x224xf32>
    %30 = vector.extract_strided_slice %10 {offsets = [0, 33], sizes = [4, 224], strides = [1, 1]} : vector<4x258xf32> to vector<4x224xf32>
    %31 = vector.extract_strided_slice %10 {offsets = [0, 34], sizes = [4, 224], strides = [1, 1]} : vector<4x258xf32> to vector<4x224xf32>
    %32 = tpu.concatenate %14, %15, %16, %17, %18, %19, %20, %21, %22, %23, %24, %25, %26, %27, %28, %29 in 0 : vector<4x224xf32>, vector<4x224xf32>, vector<4x224xf32>, vector<4x224xf32>, vector<4x224xf32>, vector<4x224xf32>, vector<4x224xf32>, vector<4x224xf32>, vector<4x224xf32>, vector<4x224xf32>, vector<4x224xf32>, vector<4x224xf32>, vector<4x224xf32>, vector<4x224xf32>, vector<4x224xf32>, vector<4x224xf32> -> vector<64x224xf32>
    %33 = tpu.concatenate %30, %31 in 0 : vector<4x224xf32>, vector<4x224xf32> -> vector<8x224xf32>
    %34 = tpu.concatenate %32, %33 in 0 : vector<64x224xf32>, vector<8x224xf32> -> vector<72x224xf32>
    %cst_13 = arith.constant dense<0.000000e+00> : vector<16x224xf32>
    %35 = tpu.matmul %0, %34, %cst_13 {dimension_numbers = #tpu.dot_dimension_numbers<[1], [0], [0], [1], [0, 0, 1, 1], [], []>} : vector<16x72xf32>, vector<72x224xf32>, vector<16x224xf32> -> vector<16x224xf32>
    %36 = vector.extract_strided_slice %35 {offsets = [0, 0], sizes = [8, 224], strides = [1, 1]} : vector<16x224xf32> to vector<8x224xf32>
    %37 = math.exp %36 : vector<8x224xf32>
    %38 = vector.extract_strided_slice %35 {offsets = [8, 0], sizes = [8, 224], strides = [1, 1]} : vector<16x224xf32> to vector<8x224xf32>
    %39 = math.cos %38 : vector<8x224xf32>
    %40 = arith.mulf %37, %39 : vector<8x224xf32>
    %c0_14 = arith.constant 0 : index
    %c0_15 = arith.constant 0 : index
    %c0_16 = arith.constant 0 : index
    %41 = vector.load %arg7[%c0_14, %c0_15, %c0_16] : memref<2x8x224xf32, #tpu.memory_space<vmem>>, vector<1x8x224xf32>
    %42 = vector.shape_cast %41 : vector<1x8x224xf32> to vector<8x224xf32>
    %43 = vector.shape_cast %40 : vector<8x224xf32> to vector<1x8x224xf32>
    tpu.vector_store %arg7[%c0_14, %c0_15, %c0_16], %43 {strides = array<i32>} : memref<2x8x224xf32, #tpu.memory_space<vmem>>, vector<1x8x224xf32>,
    %44 = math.sin %38 : vector<8x224xf32>
    %45 = arith.mulf %37, %44 : vector<8x224xf32>
    %c0_17 = arith.constant 0 : index
    %c0_18 = arith.constant 0 : index
    %c0_19 = arith.constant 0 : index
    %46 = vector.load %arg8[%c0_17, %c0_18, %c0_19] : memref<2x8x224xf32, #tpu.memory_space<vmem>>, vector<1x8x224xf32>
    %47 = vector.shape_cast %46 : vector<1x8x224xf32> to vector<8x224xf32>
    %48 = vector.shape_cast %45 : vector<8x224xf32> to vector<1x8x224xf32>
    tpu.vector_store %arg8[%c0_17, %c0_18, %c0_19], %48 {strides = array<i32>} : memref<2x8x224xf32, #tpu.memory_space<vmem>>, vector<1x8x224xf32>,
    %c1 = arith.constant 1 : index
    %c0_20 = arith.constant 0 : index
    %c0_21 = arith.constant 0 : index
    %49 = vector.load %arg1[%c1, %c0_20, %c0_21] : memref<2x4x258xf32, #tpu.memory_space<vmem>>, vector<1x4x258xf32>
    %50 = vector.shape_cast %49 : vector<1x4x258xf32> to vector<4x258xf32>
    %51 = arith.mulf %1, %50 : vector<4x258xf32>
    %52 = arith.addf %51, %2 : vector<4x258xf32>
    %c1_22 = arith.constant 1 : index
    %c0_23 = arith.constant 0 : index
    %c0_24 = arith.constant 0 : index
    %53 = vector.load %arg2[%c1_22, %c0_23, %c0_24] : memref<2x4x258xf32, #tpu.memory_space<vmem>>, vector<1x4x258xf32>
    %54 = vector.shape_cast %53 : vector<1x4x258xf32> to vector<4x258xf32>
    %55 = arith.mulf %3, %54 : vector<4x258xf32>
    %cst_25 = arith.constant 9.99999974E-6 : f32
    %56 = vector.broadcast %cst_25 : f32 to vector<4x258xf32>
    %57 = arith.addf %52, %56 : vector<4x258xf32>
    %58 = math.log %57 : vector<4x258xf32>
    %59 = vector.extract_strided_slice %58 {offsets = [0, 0], sizes = [4, 224], strides = [1, 1]} : vector<4x258xf32> to vector<4x224xf32>
    %60 = vector.extract_strided_slice %58 {offsets = [0, 1], sizes = [4, 224], strides = [1, 1]} : vector<4x258xf32> to vector<4x224xf32>
    %61 = vector.extract_strided_slice %58 {offsets = [0, 2], sizes = [4, 224], strides = [1, 1]} : vector<4x258xf32> to vector<4x224xf32>
    %62 = vector.extract_strided_slice %58 {offsets = [0, 16], sizes = [4, 224], strides = [1, 1]} : vector<4x258xf32> to vector<4x224xf32>
    %63 = vector.extract_strided_slice %58 {offsets = [0, 17], sizes = [4, 224], strides = [1, 1]} : vector<4x258xf32> to vector<4x224xf32>
    %64 = vector.extract_strided_slice %58 {offsets = [0, 18], sizes = [4, 224], strides = [1, 1]} : vector<4x258xf32> to vector<4x224xf32>
    %65 = vector.extract_strided_slice %58 {offsets = [0, 32], sizes = [4, 224], strides = [1, 1]} : vector<4x258xf32> to vector<4x224xf32>
    %66 = vector.extract_strided_slice %58 {offsets = [0, 33], sizes = [4, 224], strides = [1, 1]} : vector<4x258xf32> to vector<4x224xf32>
    %67 = vector.extract_strided_slice %58 {offsets = [0, 34], sizes = [4, 224], strides = [1, 1]} : vector<4x258xf32> to vector<4x224xf32>
    %68 = vector.extract_strided_slice %55 {offsets = [0, 0], sizes = [4, 224], strides = [1, 1]} : vector<4x258xf32> to vector<4x224xf32>
    %69 = vector.extract_strided_slice %55 {offsets = [0, 1], sizes = [4, 224], strides = [1, 1]} : vector<4x258xf32> to vector<4x224xf32>
    %70 = vector.extract_strided_slice %55 {offsets = [0, 2], sizes = [4, 224], strides = [1, 1]} : vector<4x258xf32> to vector<4x224xf32>
    %71 = vector.extract_strided_slice %55 {offsets = [0, 16], sizes = [4, 224], strides = [1, 1]} : vector<4x258xf32> to vector<4x224xf32>
    %72 = vector.extract_strided_slice %55 {offsets = [0, 17], sizes = [4, 224], strides = [1, 1]} : vector<4x258xf32> to vector<4x224xf32>
    %73 = vector.extract_strided_slice %55 {offsets = [0, 18], sizes = [4, 224], strides = [1, 1]} : vector<4x258xf32> to vector<4x224xf32>
    %74 = vector.extract_strided_slice %55 {offsets = [0, 32], sizes = [4, 224], strides = [1, 1]} : vector<4x258xf32> to vector<4x224xf32>
    %75 = vector.extract_strided_slice %55 {offsets = [0, 33], sizes = [4, 224], strides = [1, 1]} : vector<4x258xf32> to vector<4x224xf32>
    %76 = vector.extract_strided_slice %55 {offsets = [0, 34], sizes = [4, 224], strides = [1, 1]} : vector<4x258xf32> to vector<4x224xf32>
    %77 = tpu.concatenate %59, %60, %61, %62, %63, %64, %65, %66, %67, %68, %69, %70, %71, %72, %73, %74 in 0 : vector<4x224xf32>, vector<4x224xf32>, vector<4x224xf32>, vector<4x224xf32>, vector<4x224xf32>, vector<4x224xf32>, vector<4x224xf32>, vector<4x224xf32>, vector<4x224xf32>, vector<4x224xf32>, vector<4x224xf32>, vector<4x224xf32>, vector<4x224xf32>, vector<4x224xf32>, vector<4x224xf32>, vector<4x224xf32> -> vector<64x224xf32>
    %78 = tpu.concatenate %75, %76 in 0 : vector<4x224xf32>, vector<4x224xf32> -> vector<8x224xf32>
    %79 = tpu.concatenate %77, %78 in 0 : vector<64x224xf32>, vector<8x224xf32> -> vector<72x224xf32>
    %cst_26 = arith.constant dense<0.000000e+00> : vector<16x224xf32>
    %80 = tpu.matmul %0, %79, %cst_26 {dimension_numbers = #tpu.dot_dimension_numbers<[1], [0], [0], [1], [0, 0, 1, 1], [], []>} : vector<16x72xf32>, vector<72x224xf32>, vector<16x224xf32> -> vector<16x224xf32>
    %81 = vector.extract_strided_slice %80 {offsets = [0, 0], sizes = [8, 224], strides = [1, 1]} : vector<16x224xf32> to vector<8x224xf32>
    %82 = math.exp %81 : vector<8x224xf32>
    %83 = vector.extract_strided_slice %80 {offsets = [8, 0], sizes = [8, 224], strides = [1, 1]} : vector<16x224xf32> to vector<8x224xf32>
    %84 = math.cos %83 : vector<8x224xf32>
    %85 = arith.mulf %82, %84 : vector<8x224xf32>
    %c1_27 = arith.constant 1 : index
    %c0_28 = arith.constant 0 : index
    %c0_29 = arith.constant 0 : index
    %86 = vector.load %arg7[%c1_27, %c0_28, %c0_29] : memref<2x8x224xf32, #tpu.memory_space<vmem>>, vector<1x8x224xf32>
    %87 = vector.shape_cast %86 : vector<1x8x224xf32> to vector<8x224xf32>
    %88 = vector.shape_cast %85 : vector<8x224xf32> to vector<1x8x224xf32>
    tpu.vector_store %arg7[%c1_27, %c0_28, %c0_29], %88 {strides = array<i32>} : memref<2x8x224xf32, #tpu.memory_space<vmem>>, vector<1x8x224xf32>,
    %89 = math.sin %83 : vector<8x224xf32>
    %90 = arith.mulf %82, %89 : vector<8x224xf32>
    %c1_30 = arith.constant 1 : index
    %c0_31 = arith.constant 0 : index
    %c0_32 = arith.constant 0 : index
    %91 = vector.load %arg8[%c1_30, %c0_31, %c0_32] : memref<2x8x224xf32, #tpu.memory_space<vmem>>, vector<1x8x224xf32>
    %92 = vector.shape_cast %91 : vector<1x8x224xf32> to vector<8x224xf32>
    %93 = vector.shape_cast %90 : vector<8x224xf32> to vector<1x8x224xf32>
    tpu.vector_store %arg8[%c1_30, %c0_31, %c0_32], %93 {strides = array<i32>} : memref<2x8x224xf32, #tpu.memory_space<vmem>>, vector<1x8x224xf32>,
    return
  }
  func.func @transform_0(%arg0: i32) -> (i32, i32, i32) {
    %c0_i32 = arith.constant 0 : i32
    %c0_i32_0 = arith.constant 0 : i32
    %c0_i32_1 = arith.constant 0 : i32
    return %arg0, %c0_i32, %c0_i32_0 : i32, i32, i32
  }
  func.func @transform_1(%arg0: i32) -> (i32, i32, i32) {
    %c0_i32 = arith.constant 0 : i32
    %c0_i32_0 = arith.constant 0 : i32
    %c0_i32_1 = arith.constant 0 : i32
    return %arg0, %c0_i32, %c0_i32_0 : i32, i32, i32
  }
  func.func @transform_2(%arg0: i32) -> (i32, i32) {
    %c0_i32 = arith.constant 0 : i32
    %c0_i32_0 = arith.constant 0 : i32
    %c0_i32_1 = arith.constant 0 : i32
    return %c0_i32, %c0_i32_0 : i32, i32
  }
  func.func @transform_3(%arg0: i32) -> (i32, i32) {
    %c0_i32 = arith.constant 0 : i32
    %c0_i32_0 = arith.constant 0 : i32
    %c0_i32_1 = arith.constant 0 : i32
    return %c0_i32, %c0_i32_0 : i32, i32
  }
  func.func @transform_4(%arg0: i32) -> (i32, i32) {
    %c0_i32 = arith.constant 0 : i32
    %c0_i32_0 = arith.constant 0 : i32
    %c0_i32_1 = arith.constant 0 : i32
    return %c0_i32, %c0_i32_0 : i32, i32
  }
  func.func @transform_5(%arg0: i32) -> (i32, i32) {
    %c0_i32 = arith.constant 0 : i32
    %c0_i32_0 = arith.constant 0 : i32
    %c0_i32_1 = arith.constant 0 : i32
    return %c0_i32, %c0_i32_0 : i32, i32
  }
  func.func @transform_6(%arg0: i32) -> (i32, i32, i32) {
    %c0_i32 = arith.constant 0 : i32
    %c0_i32_0 = arith.constant 0 : i32
    %c0_i32_1 = arith.constant 0 : i32
    return %arg0, %c0_i32, %c0_i32_0 : i32, i32, i32
  }
  func.func @transform_7(%arg0: i32) -> (i32, i32, i32) {
    %c0_i32 = arith.constant 0 : i32
    %c0_i32_0 = arith.constant 0 : i32
    %c0_i32_1 = arith.constant 0 : i32
    return %arg0, %c0_i32, %c0_i32_0 : i32, i32, i32
  }
}

</mosaic_0001>

<llo_original>
// kernel: custom-call.1
$region0: #{custom-call.1}
  %s0 = inlined_call_operand.hbm [shape: c64[2,4,16,16], index: 0, kind: input, shape index: {}]
  %s1 = inlined_call_operand.vmem [shape: f32[2,4,16,16], index: 1, kind: output, shape index: {}]
  %s2 = scalar_lea.hbm %s0, 128
  $region1: #{custom-call.1} parent=0
    #allocation0 [shape = 's32[1]{0}', space=sflag, size = 0x4, scoped, tag = 'scoped memory for custom-call.1']
    %3 = vsyncpa [#allocation0], 0
    %s5 = sshll.u32 %s2, 4
    %s6 = int_to_ptr.hbm [resolvable:$true] %s5
    %s7 = sshll.u32 %s1, 4
    %s8 = int_to_ptr.vmem [resolvable:$true] %s7
    %10 = dma.hbm_to_vmem [thread:$0]  %s6, 2048, %s8, [#allocation0]
    %12 = dma.done [#allocation0], 2048
    %13 = vsyncpa [#allocation0], 1

// kernel: custom-call
$region0: #{custom-call}
  %s0 = inlined_call_operand.hbm [shape: c64[2,4,16,16], index: 0, kind: input, shape index: {}]
  %s1 = inlined_call_operand.vmem [shape: f32[2,4,16,16], index: 1, kind: output, shape index: {}]
  $region1: #{custom-call} parent=0
    #allocation0 [shape = 's32[1]{0}', space=sflag, size = 0x4, scoped, tag = 'scoped memory for custom-call']
    %2 = vsyncpa [#allocation0], 0
    %s4 = sshll.u32 %s0, 4
    %s5 = int_to_ptr.hbm [resolvable:$true] %s4
    %s6 = sshll.u32 %s1, 4
    %s7 = int_to_ptr.vmem [resolvable:$true] %s6
    %9 = dma.hbm_to_vmem [thread:$0]  %s5, 2048, %s7, [#allocation0]
    %11 = dma.done [#allocation0], 2048
    %12 = vsyncpa [#allocation0], 1

// kernel: custom-call.2
$region0: #{custom-call.2}
  %s0 = inlined_call_operand.vmem [shape: f32[2,8,14,14], index: 0, kind: input, shape index: {}]
  %s1 = inlined_call_operand.vmem [shape: f32[2,8,14,14], index: 1, kind: input, shape index: {}]
  %s2 = inlined_call_operand.vmem [shape: c64[2,8,14,14], index: 2, kind: output, shape index: {}]
  %s3 = scalar_lea.vmem %s2, 256
  %v4 = vld [vmem:[%s0] sm:$0xff]
  %5 = vst [vmem:[%s2] sm:$0xff] %v4
  %s6 = scalar_lea.vmem %s2, 8
  %s7 = scalar_lea.vmem %s0, 8
  %v8 = vld [vmem:[%s7] sm:$0xff]
  %9 = vst [vmem:[%s6] sm:$0xff] %v8
  %s10 = scalar_lea.vmem %s2, 16
  %s11 = scalar_lea.vmem %s0, 16
  %v12 = vld [vmem:[%s11] sm:$0xff]
  %13 = vst [vmem:[%s10] sm:$0xff] %v12
  %s14 = scalar_lea.vmem %s2, 24
  %s15 = scalar_lea.vmem %s0, 24
  %v16 = vld [vmem:[%s15] sm:$0xff]
  %17 = vst [vmem:[%s14] sm:$0xff] %v16
  %s18 = scalar_lea.vmem %s2, 32
  %s19 = scalar_lea.vmem %s0, 32
  %v20 = vld [vmem:[%s19] sm:$0xff]
  %21 = vst [vmem:[%s18] sm:$0xff] %v20
  %s22 = scalar_lea.vmem %s2, 40
  %s23 = scalar_lea.vmem %s0, 40
  %v24 = vld [vmem:[%s23] sm:$0xff]
  %25 = vst [vmem:[%s22] sm:$0xff] %v24
  %s26 = scalar_lea.vmem %s2, 48
  %s27 = scalar_lea.vmem %s0, 48
  %v28 = vld [vmem:[%s27] sm:$0xff]
  %29 = vst [vmem:[%s26] sm:$0xff] %v28
  %s30 = scalar_lea.vmem %s2, 56
  %s31 = scalar_lea.vmem %s0, 56
  %v32 = vld [vmem:[%s31] sm:$0xff]
  %33 = vst [vmem:[%s30] sm:$0xff] %v32
  %s34 = scalar_lea.vmem %s2, 64
  %s35 = scalar_lea.vmem %s0, 64
  %v36 = vld [vmem:[%s35] sm:$0xff]
  %37 = vst [vmem:[%s34] sm:$0xff] %v36
  %s38 = scalar_lea.vmem %s2, 72
  %s39 = scalar_lea.vmem %s0, 72
  %v40 = vld [vmem:[%s39] sm:$0xff]
  %41 = vst [vmem:[%s38] sm:$0xff] %v40
  %s42 = scalar_lea.vmem %s2, 80
  %s43 = scalar_lea.vmem %s0, 80
  %v44 = vld [vmem:[%s43] sm:$0xff]
  %45 = vst [vmem:[%s42] sm:$0xff] %v44
  %s46 = scalar_lea.vmem %s2, 88
  %s47 = scalar_lea.vmem %s0, 88
  %v48 = vld [vmem:[%s47] sm:$0xff]
  %49 = vst [vmem:[%s46] sm:$0xff] %v48
  %s50 = scalar_lea.vmem %s2, 96
  %s51 = scalar_lea.vmem %s0, 96
  %v52 = vld [vmem:[%s51] sm:$0xff]
  %53 = vst [vmem:[%s50] sm:$0xff] %v52
  %s54 = scalar_lea.vmem %s2, 104
  %s55 = scalar_lea.vmem %s0, 104
  %v56 = vld [vmem:[%s55] sm:$0xff]
  %57 = vst [vmem:[%s54] sm:$0xff] %v56
  %s58 = scalar_lea.vmem %s2, 112
  %s59 = scalar_lea.vmem %s0, 112
  %v60 = vld [vmem:[%s59] sm:$0xff]
  %61 = vst [vmem:[%s58] sm:$0xff] %v60
  %s62 = scalar_lea.vmem %s2, 120
  %s63 = scalar_lea.vmem %s0, 120
  %v64 = vld [vmem:[%s63] sm:$0xff]
  %65 = vst [vmem:[%s62] sm:$0xff] %v64
  %s66 = scalar_lea.vmem %s2, 128
  %s67 = scalar_lea.vmem %s0, 128
  %v68 = vld [vmem:[%s67] sm:$0xff]
  %69 = vst [vmem:[%s66] sm:$0xff] %v68
  %s70 = scalar_lea.vmem %s2, 136
  %s71 = scalar_lea.vmem %s0, 136
  %v72 = vld [vmem:[%s71] sm:$0xff]
  %73 = vst [vmem:[%s70] sm:$0xff] %v72
  %s74 = scalar_lea.vmem %s2, 144
  %s75 = scalar_lea.vmem %s0, 144
  %v76 = vld [vmem:[%s75] sm:$0xff]
  %77 = vst [vmem:[%s74] sm:$0xff] %v76
  %s78 = scalar_lea.vmem %s2, 152
  %s79 = scalar_lea.vmem %s0, 152
  %v80 = vld [vmem:[%s79] sm:$0xff]
  %81 = vst [vmem:[%s78] sm:$0xff] %v80
  %s82 = scalar_lea.vmem %s2, 160
  %s83 = scalar_lea.vmem %s0, 160
  %v84 = vld [vmem:[%s83] sm:$0xff]
  %85 = vst [vmem:[%s82] sm:$0xff] %v84
  %s86 = scalar_lea.vmem %s2, 168
  %s87 = scalar_lea.vmem %s0, 168
  %v88 = vld [vmem:[%s87] sm:$0xff]
  %89 = vst [vmem:[%s86] sm:$0xff] %v88
  %s90 = scalar_lea.vmem %s2, 176
  %s91 = scalar_lea.vmem %s0, 176
  %v92 = vld [vmem:[%s91] sm:$0xff]
  %93 = vst [vmem:[%s90] sm:$0xff] %v92
  %s94 = scalar_lea.vmem %s2, 184
  %s95 = scalar_lea.vmem %s0, 184
  %v96 = vld [vmem:[%s95] sm:$0xff]
  %97 = vst [vmem:[%s94] sm:$0xff] %v96
  %s98 = scalar_lea.vmem %s2, 192
  %s99 = scalar_lea.vmem %s0, 192
  %v100 = vld [vmem:[%s99] sm:$0xff]
  %101 = vst [vmem:[%s98] sm:$0xff] %v100
  %s102 = scalar_lea.vmem %s2, 200
  %s103 = scalar_lea.vmem %s0, 200
  %v104 = vld [vmem:[%s103] sm:$0xff]
  %105 = vst [vmem:[%s102] sm:$0xff] %v104
  %s106 = scalar_lea.vmem %s2, 208
  %s107 = scalar_lea.vmem %s0, 208
  %v108 = vld [vmem:[%s107] sm:$0xff]
  %109 = vst [vmem:[%s106] sm:$0xff] %v108
  %s110 = scalar_lea.vmem %s2, 216
  %s111 = scalar_lea.vmem %s0, 216
  %v112 = vld [vmem:[%s111] sm:$0xff]
  %113 = vst [vmem:[%s110] sm:$0xff] %v112
  %s114 = scalar_lea.vmem %s2, 224
  %s115 = scalar_lea.vmem %s0, 224
  %v116 = vld [vmem:[%s115] sm:$0xff]
  %117 = vst [vmem:[%s114] sm:$0xff] %v116
  %s118 = scalar_lea.vmem %s2, 232
  %s119 = scalar_lea.vmem %s0, 232
  %v120 = vld [vmem:[%s119] sm:$0xff]
  %121 = vst [vmem:[%s118] sm:$0xff] %v120
  %s122 = scalar_lea.vmem %s2, 240
  %s123 = scalar_lea.vmem %s0, 240
  %v124 = vld [vmem:[%s123] sm:$0xff]
  %125 = vst [vmem:[%s122] sm:$0xff] %v124
  %s126 = scalar_lea.vmem %s2, 248
  %s127 = scalar_lea.vmem %s0, 248
  %v128 = vld [vmem:[%s127] sm:$0xff]
  %129 = vst [vmem:[%s126] sm:$0xff] %v128
  %v130 = vld [vmem:[%s1] sm:$0xff]
  %131 = vst [vmem:[%s3] sm:$0xff] %v130
  %s132 = scalar_lea.vmem %s3, 8
  %s133 = scalar_lea.vmem %s1, 8
  %v134 = vld [vmem:[%s133] sm:$0xff]
  %135 = vst [vmem:[%s132] sm:$0xff] %v134
  %s136 = scalar_lea.vmem %s3, 16
  %s137 = scalar_lea.vmem %s1, 16
  %v138 = vld [vmem:[%s137] sm:$0xff]
  %139 = vst [vmem:[%s136] sm:$0xff] %v138
  %s140 = scalar_lea.vmem %s3, 24
  %s141 = scalar_lea.vmem %s1, 24
  %v142 = vld [vmem:[%s141] sm:$0xff]
  %143 = vst [vmem:[%s140] sm:$0xff] %v142
  %s144 = scalar_lea.vmem %s3, 32
  %s145 = scalar_lea.vmem %s1, 32
  %v146 = vld [vmem:[%s145] sm:$0xff]
  %147 = vst [vmem:[%s144] sm:$0xff] %v146
  %s148 = scalar_lea.vmem %s3, 40
  %s149 = scalar_lea.vmem %s1, 40
  %v150 = vld [vmem:[%s149] sm:$0xff]
  %151 = vst [vmem:[%s148] sm:$0xff] %v150
  %s152 = scalar_lea.vmem %s3, 48
  %s153 = scalar_lea.vmem %s1, 48
  %v154 = vld [vmem:[%s153] sm:$0xff]
  %155 = vst [vmem:[%s152] sm:$0xff] %v154
  %s156 = scalar_lea.vmem %s3, 56
  %s157 = scalar_lea.vmem %s1, 56
  %v158 = vld [vmem:[%s157] sm:$0xff]
  %159 = vst [vmem:[%s156] sm:$0xff] %v158
  %s160 = scalar_lea.vmem %s3, 64
  %s161 = scalar_lea.vmem %s1, 64
  %v162 = vld [vmem:[%s161] sm:$0xff]
  %163 = vst [vmem:[%s160] sm:$0xff] %v162
  %s164 = scalar_lea.vmem %s3, 72
  %s165 = scalar_lea.vmem %s1, 72
  %v166 = vld [vmem:[%s165] sm:$0xff]
  %167 = vst [vmem:[%s164] sm:$0xff] %v166
  %s168 = scalar_lea.vmem %s3, 80
  %s169 = scalar_lea.vmem %s1, 80
  %v170 = vld [vmem:[%s169] sm:$0xff]
  %171 = vst [vmem:[%s168] sm:$0xff] %v170
  %s172 = scalar_lea.vmem %s3, 88
  %s173 = scalar_lea.vmem %s1, 88
  %v174 = vld [vmem:[%s173] sm:$0xff]
  %175 = vst [vmem:[%s172] sm:$0xff] %v174
  %s176 = scalar_lea.vmem %s3, 96
  %s177 = scalar_lea.vmem %s1, 96
  %v178 = vld [vmem:[%s177] sm:$0xff]
  %179 = vst [vmem:[%s176] sm:$0xff] %v178
  %s180 = scalar_lea.vmem %s3, 104
  %s181 = scalar_lea.vmem %s1, 104
  %v182 = vld [vmem:[%s181] sm:$0xff]
  %183 = vst [vmem:[%s180] sm:$0xff] %v182
  %s184 = scalar_lea.vmem %s3, 112
  %s185 = scalar_lea.vmem %s1, 112
  %v186 = vld [vmem:[%s185] sm:$0xff]
  %187 = vst [vmem:[%s184] sm:$0xff] %v186
  %s188 = scalar_lea.vmem %s3, 120
  %s189 = scalar_lea.vmem %s1, 120
  %v190 = vld [vmem:[%s189] sm:$0xff]
  %191 = vst [vmem:[%s188] sm:$0xff] %v190
  %s192 = scalar_lea.vmem %s3, 128
  %s193 = scalar_lea.vmem %s1, 128
  %v194 = vld [vmem:[%s193] sm:$0xff]
  %195 = vst [vmem:[%s192] sm:$0xff] %v194
  %s196 = scalar_lea.vmem %s3, 136
  %s197 = scalar_lea.vmem %s1, 136
  %v198 = vld [vmem:[%s197] sm:$0xff]
  %199 = vst [vmem:[%s196] sm:$0xff] %v198
  %s200 = scalar_lea.vmem %s3, 144
  %s201 = scalar_lea.vmem %s1, 144
  %v202 = vld [vmem:[%s201] sm:$0xff]
  %203 = vst [vmem:[%s200] sm:$0xff] %v202
  %s204 = scalar_lea.vmem %s3, 152
  %s205 = scalar_lea.vmem %s1, 152
  %v206 = vld [vmem:[%s205] sm:$0xff]
  %207 = vst [vmem:[%s204] sm:$0xff] %v206
  %s208 = scalar_lea.vmem %s3, 160
  %s209 = scalar_lea.vmem %s1, 160
  %v210 = vld [vmem:[%s209] sm:$0xff]
  %211 = vst [vmem:[%s208] sm:$0xff] %v210
  %s212 = scalar_lea.vmem %s3, 168
  %s213 = scalar_lea.vmem %s1, 168
  %v214 = vld [vmem:[%s213] sm:$0xff]
  %215 = vst [vmem:[%s212] sm:$0xff] %v214
  %s216 = scalar_lea.vmem %s3, 176
  %s217 = scalar_lea.vmem %s1, 176
  %v218 = vld [vmem:[%s217] sm:$0xff]
  %219 = vst [vmem:[%s216] sm:$0xff] %v218
  %s220 = scalar_lea.vmem %s3, 184
  %s221 = scalar_lea.vmem %s1, 184
  %v222 = vld [vmem:[%s221] sm:$0xff]
  %223 = vst [vmem:[%s220] sm:$0xff] %v222
  %s224 = scalar_lea.vmem %s3, 192
  %s225 = scalar_lea.vmem %s1, 192
  %v226 = vld [vmem:[%s225] sm:$0xff]
  %227 = vst [vmem:[%s224] sm:$0xff] %v226
  %s228 = scalar_lea.vmem %s3, 200
  %s229 = scalar_lea.vmem %s1, 200
  %v230 = vld [vmem:[%s229] sm:$0xff]
  %231 = vst [vmem:[%s228] sm:$0xff] %v230
  %s232 = scalar_lea.vmem %s3, 208
  %s233 = scalar_lea.vmem %s1, 208
  %v234 = vld [vmem:[%s233] sm:$0xff]
  %235 = vst [vmem:[%s232] sm:$0xff] %v234
  %s236 = scalar_lea.vmem %s3, 216
  %s237 = scalar_lea.vmem %s1, 216
  %v238 = vld [vmem:[%s237] sm:$0xff]
  %239 = vst [vmem:[%s236] sm:$0xff] %v238
  %s240 = scalar_lea.vmem %s3, 224
  %s241 = scalar_lea.vmem %s1, 224
  %v242 = vld [vmem:[%s241] sm:$0xff]
  %243 = vst [vmem:[%s240] sm:$0xff] %v242
  %s244 = scalar_lea.vmem %s3, 232
  %s245 = scalar_lea.vmem %s1, 232
  %v246 = vld [vmem:[%s245] sm:$0xff]
  %247 = vst [vmem:[%s244] sm:$0xff] %v246
  %s248 = scalar_lea.vmem %s3, 240
  %s249 = scalar_lea.vmem %s1, 240
  %v250 = vld [vmem:[%s249] sm:$0xff]
  %251 = vst [vmem:[%s248] sm:$0xff] %v250
  %s252 = scalar_lea.vmem %s3, 248
  %s253 = scalar_lea.vmem %s1, 248
  %v254 = vld [vmem:[%s253] sm:$0xff]
  %255 = vst [vmem:[%s252] sm:$0xff] %v254

// kernel: wfm_conv2d.1
$region0: #{wfm_conv2d.1}
  #allocation0 [shape = 'u32[]', space=smem, size = 0x4, offset = 0x4, fixed_abs, tag = 'smem constant byte address 0x4 - core index']
  #allocation1 [shape = 'u32[72,128]{1,0:T(1,128)}', space=vmem, size = 0x9000, scoped, tag = 'internal scratch']
  %s0 = inlined_call_operand.vmem [shape: f32[2,4,258], index: 0, kind: input, shape index: {}]
  %s1 = inlined_call_operand.vmem [shape: f32[2,4,258], index: 1, kind: input, shape index: {}]
  %s2 = inlined_call_operand.vmem [shape: f32[4,258], index: 2, kind: input, shape index: {}]
  %s3 = inlined_call_operand.vmem [shape: f32[4,258], index: 3, kind: input, shape index: {}]
  %s4 = inlined_call_operand.vmem [shape: f32[4,258], index: 4, kind: input, shape index: {}]
  %s5 = inlined_call_operand.vmem [shape: f32[16,72], index: 5, kind: input, shape index: {}]
  %s6 = inlined_call_operand.vmem [shape: f32[2,8,224], index: 6, kind: output, shape index: {0}]
  %s7 = inlined_call_operand.vmem [shape: f32[2,8,224], index: 7, kind: output, shape index: {1}]
  %8 = xla_tuple %s6, %s7
  %s9 = sld [smem:[#allocation0]]
  $region42: #{wfm_conv2d.1} parent=0
    _
  %s11 = ssub.s32 1, %s9
  %s12 = scalar_select 0, %s11, %s9
  // Predicated region
  $region2: #{wfm_conv2d.1} parent=0 // pred_check
    _
  $region3: #{wfm_conv2d.1} parent=0 // pred_check_branch
    %14 = sbr.rel (0) target = $region5
  $region4: #{wfm_conv2d.1} parent=0 // pred_region
    _
  $region5: #{wfm_conv2d.1} parent=0 // pred_fallthru
    _
  // Predicated region
  $region6: #{wfm_conv2d.1} parent=0 // pred_check
    _
  $region7: #{wfm_conv2d.1} parent=0 // pred_check_branch
    %16 = sbr.rel (0) target = $region9
  $region8: #{wfm_conv2d.1} parent=0 // pred_region
    _
  $region9: #{wfm_conv2d.1} parent=0 // pred_fallthru
    _
  // Predicated region
  $region10: #{wfm_conv2d.1} parent=0 // pred_check
    _
  $region11: #{wfm_conv2d.1} parent=0 // pred_check_branch
    %18 = sbr.rel (0) target = $region13
  $region12: #{wfm_conv2d.1} parent=0 // pred_region
    _
  $region13: #{wfm_conv2d.1} parent=0 // pred_fallthru
    _
  // Predicated region
  $region14: #{wfm_conv2d.1} parent=0 // pred_check
    _
  $region15: #{wfm_conv2d.1} parent=0 // pred_check_branch
    %20 = sbr.rel (0) target = $region17
  $region16: #{wfm_conv2d.1} parent=0 // pred_region
    _
  $region17: #{wfm_conv2d.1} parent=0 // pred_fallthru
    _
  // Predicated region
  $region18: #{wfm_conv2d.1} parent=0 // pred_check
    _
  $region19: #{wfm_conv2d.1} parent=0 // pred_check_branch
    %22 = sbr.rel (0) target = $region21
  $region20: #{wfm_conv2d.1} parent=0 // pred_region
    _
  $region21: #{wfm_conv2d.1} parent=0 // pred_fallthru
    _
  // Predicated region
  $region22: #{wfm_conv2d.1} parent=0 // pred_check
    _
  $region23: #{wfm_conv2d.1} parent=0 // pred_check_branch
    %24 = sbr.rel (0) target = $region25
  $region24: #{wfm_conv2d.1} parent=0 // pred_region
    _
  $region25: #{wfm_conv2d.1} parent=0 // pred_fallthru
    _
  %v25 = vld [vmem:[%s5] sm:$0xff]
  %v26 = vld [vmem:[%s5 + $0x8] sm:$0xff]
  %v27 = vld [vmem:[%s2] sm:$0xff]
  %v28 = vld [vmem:[%s2 + $0x8] sm:$0xf]
  %v29 = vld [vmem:[%s3] sm:$0xff]
  %v30 = vld [vmem:[%s3 + $0x8] sm:$0xf]
  %v31 = vld [vmem:[%s4] sm:$0xff]
  %v32 = vld [vmem:[%s4 + $0x8] sm:$0xf]
  %v33 = vld [vmem:[%s0] sm:$0xff]
  %v34 = vld [vmem:[%s0 + $0x8] sm:$0xf]
  %v35 = vmul.f32 %v27, %v33
  %v36 = vmul.f32 %v28, %v34
  %v37 = vadd.f32 %v35, %v29
  %v38 = vadd.f32 %v36, %v30
  %v39 = vld [vmem:[%s1] sm:$0xff]
  %v40 = vld [vmem:[%s1 + $0x8] sm:$0xf]
  %v41 = vmul.f32 %v31, %v39
  %v42 = vmul.f32 %v32, %v40
  %v43 = vadd.f32 %v37, 1e-05
  %v44 = vadd.f32 %v38, 1e-05
  %v45 = vlog2.pop %v43
  %v46 = vmul.f32 %v45, 0.6931472
  %v47 = vlog2.pop %v44
  %v48 = vmul.f32 %v47, 0.6931472
  %50 = vst [vmem:[#allocation1] ss:$2 sm:$0xff] %v46
  %v51 = vld.sshfl [vmem:[#allocation1] sm:$0xff pattern:$0x75316420]
  %v52 = vld.sshfl [vmem:[#allocation1 + $0x8] sm:$0xff pattern:$0x75316420]
  %s55 = scalar_lea.vmem [#allocation1], 1
  %56 = vst [vmem:[%s55] ss:$2 sm:$0xff] %v46
  %v57 = vld.sshfl [vmem:[#allocation1] sm:$0xff pattern:$0x75316420]
  %v58 = vld.sshfl [vmem:[#allocation1 + $0x8] sm:$0xff pattern:$0x75316420]
  %59 = vrot.lane.b32.xlu0 %v57, 127
  %v60 = vpop.permute.xlu0 %59
  %61 = vrot.lane.b32.xlu0 %v58, 127
  %v62 = vpop.permute.xlu0 %61
  %vm63 = vcmask 1039360
  %v64 = vsel %vm63, %v60, %v62
  %67 = vst [vmem:[#allocation1] ss:$2 sm:$0xff] %v46
  %v68 = vld.sshfl [vmem:[#allocation1] sm:$0xff pattern:$0x75316420]
  %v69 = vld.sshfl [vmem:[#allocation1 + $0x8] sm:$0xff pattern:$0x75316420]
  %70 = vrot.lane.b32.xlu0 %v68, 126
  %v71 = vpop.permute.xlu0 %70
  %72 = vrot.lane.b32.xlu0 %v69, 126
  %v73 = vpop.permute.xlu0 %72
  %vm74 = vcmask 1031168
  %v75 = vsel %vm74, %v71, %v73
  %s78 = scalar_lea.vmem [#allocation1], 1
  %79 = vst [vmem:[%s78] ss:$2 sm:$0xff] %v46
  %v80 = vld.sshfl [vmem:[#allocation1] sm:$0xff pattern:$0x75316420]
  %v81 = vld.sshfl [vmem:[#allocation1 + $0x8] sm:$0xff pattern:$0x75316420]
  %82 = vrot.lane.b32.xlu0 %v80, 112
  %v83 = vpop.permute.xlu0 %82
  %84 = vrot.lane.b32.xlu0 %v81, 112
  %v85 = vpop.permute.xlu0 %84
  %vm86 = vcmask 916480
  %v87 = vsel %vm86, %v83, %v85
  %90 = vst [vmem:[#allocation1] ss:$2 sm:$0xff] %v46
  %v91 = vld.sshfl [vmem:[#allocation1] sm:$0xff pattern:$0x75316420]
  %v92 = vld.sshfl [vmem:[#allocation1 + $0x8] sm:$0xff pattern:$0x75316420]
  %93 = vrot.lane.b32.xlu0 %v91, 111
  %v94 = vpop.permute.xlu0 %93
  %95 = vrot.lane.b32.xlu0 %v92, 111
  %v96 = vpop.permute.xlu0 %95
  %vm97 = vcmask 908288
  %v98 = vsel %vm97, %v94, %v96
  %s101 = scalar_lea.vmem [#allocation1], 1
  %102 = vst [vmem:[%s101] ss:$2 sm:$0xff] %v46
  %v103 = vld.sshfl [vmem:[#allocation1] sm:$0xff pattern:$0x75316420]
  %v104 = vld.sshfl [vmem:[#allocation1 + $0x8] sm:$0xff pattern:$0x75316420]
  %105 = vrot.lane.b32.xlu0 %v103, 110
  %v106 = vpop.permute.xlu0 %105
  %107 = vrot.lane.b32.xlu0 %v104, 110
  %v108 = vpop.permute.xlu0 %107
  %vm109 = vcmask 900096
  %v110 = vsel %vm109, %v106, %v108
  %113 = vst [vmem:[#allocation1] ss:$2 sm:$0xff] %v46
  %v114 = vld.sshfl [vmem:[#allocation1] sm:$0xff pattern:$0x75316420]
  %v115 = vld.sshfl [vmem:[#allocation1 + $0x8] sm:$0xff pattern:$0x75316420]
  %116 = vrot.lane.b32.xlu0 %v114, 96
  %v117 = vpop.permute.xlu0 %116
  %118 = vrot.lane.b32.xlu0 %v115, 96
  %v119 = vpop.permute.xlu0 %118
  %vm120 = vcmask 785408
  %v121 = vsel %vm120, %v117, %v119
  %s125 = scalar_lea.vmem [#allocation1], 1
  %126 = vst [vmem:[%s125] ss:$2 sm:$0xff] %v46
  %s127 = scalar_lea.vmem [#allocation1], 17
  %128 = vst [vmem:[%s127] ss:$2 sm:$0xff] %v48
  %v129 = vld.sshfl [vmem:[#allocation1] sm:$0xff pattern:$0x75316420]
  %v130 = vld.sshfl [vmem:[#allocation1 + $0x8] sm:$0xff pattern:$0x75316420]
  %v131 = vld.sshfl [vmem:[#allocation1 + $0x10] sm:$0xff pattern:$0x75316420]
  %132 = vrot.lane.b32.xlu0 %v129, 95
  %v133 = vpop.permute.xlu0 %132
  %134 = vrot.lane.b32.xlu0 %v130, 95
  %v135 = vpop.permute.xlu0 %134
  %136 = vrot.lane.b32.xlu0 %v131, 95
  %v137 = vpop.permute.xlu0 %136
  %vm138 = vcmask 777216
  %v139 = vsel %vm138, %v133, %v135
  %v140 = vsel %vm138, %v135, %v137
  %143 = vst [vmem:[#allocation1] ss:$2 sm:$0xff] %v46
  %s144 = scalar_lea.vmem [#allocation1], 16
  %145 = vst [vmem:[%s144] ss:$2 sm:$0xff] %v48
  %v146 = vld.sshfl [vmem:[#allocation1] sm:$0xff pattern:$0x75316420]
  %v147 = vld.sshfl [vmem:[#allocation1 + $0x8] sm:$0xff pattern:$0x75316420]
  %v148 = vld.sshfl [vmem:[#allocation1 + $0x10] sm:$0xff pattern:$0x75316420]
  %149 = vrot.lane.b32.xlu0 %v146, 94
  %v150 = vpop.permute.xlu0 %149
  %151 = vrot.lane.b32.xlu0 %v147, 94
  %v152 = vpop.permute.xlu0 %151
  %153 = vrot.lane.b32.xlu0 %v148, 94
  %v154 = vpop.permute.xlu0 %153
  %vm155 = vcmask 769024
  %v156 = vsel %vm155, %v150, %v152
  %v157 = vsel %vm155, %v152, %v154
  %s161 = scalar_lea.vmem [#allocation1], 1
  %162 = vst [vmem:[%s161] ss:$2 sm:$0xff] %v41
  %v163 = vld.sshfl [vmem:[#allocation1] sm:$0xff pattern:$0x75316420]
  %v164 = vld.sshfl [vmem:[#allocation1 + $0x8] sm:$0xff pattern:$0x75316420]
  %167 = vst [vmem:[#allocation1] ss:$2 sm:$0xff] %v41
  %v168 = vld.sshfl [vmem:[#allocation1] sm:$0xff pattern:$0x75316420]
  %v169 = vld.sshfl [vmem:[#allocation1 + $0x8] sm:$0xff pattern:$0x75316420]
  %170 = vrot.lane.b32.xlu0 %v168, 127
  %v171 = vpop.permute.xlu0 %170
  %172 = vrot.lane.b32.xlu0 %v169, 127
  %v173 = vpop.permute.xlu0 %172
  %v174 = vsel %vm63, %v171, %v173
  %s177 = scalar_lea.vmem [#allocation1], 1
  %178 = vst [vmem:[%s177] ss:$2 sm:$0xff] %v41
  %v179 = vld.sshfl [vmem:[#allocation1] sm:$0xff pattern:$0x75316420]
  %v180 = vld.sshfl [vmem:[#allocation1 + $0x8] sm:$0xff pattern:$0x75316420]
  %181 = vrot.lane.b32.xlu0 %v179, 126
  %v182 = vpop.permute.xlu0 %181
  %183 = vrot.lane.b32.xlu0 %v180, 126
  %v184 = vpop.permute.xlu0 %183
  %v185 = vsel %vm74, %v182, %v184
  %188 = vst [vmem:[#allocation1] ss:$2 sm:$0xff] %v41
  %v189 = vld.sshfl [vmem:[#allocation1] sm:$0xff pattern:$0x75316420]
  %v190 = vld.sshfl [vmem:[#allocation1 + $0x8] sm:$0xff pattern:$0x75316420]
  %191 = vrot.lane.b32.xlu0 %v189, 112
  %v192 = vpop.permute.xlu0 %191
  %193 = vrot.lane.b32.xlu0 %v190, 112
  %v194 = vpop.permute.xlu0 %193
  %v195 = vsel %vm86, %v192, %v194
  %s198 = scalar_lea.vmem [#allocation1], 1
  %199 = vst [vmem:[%s198] ss:$2 sm:$0xff] %v41
  %v200 = vld.sshfl [vmem:[#allocation1] sm:$0xff pattern:$0x75316420]
  %v201 = vld.sshfl [vmem:[#allocation1 + $0x8] sm:$0xff pattern:$0x75316420]
  %202 = vrot.lane.b32.xlu0 %v200, 111
  %v203 = vpop.permute.xlu0 %202
  %204 = vrot.lane.b32.xlu0 %v201, 111
  %v205 = vpop.permute.xlu0 %204
  %v206 = vsel %vm97, %v203, %v205
  %209 = vst [vmem:[#allocation1] ss:$2 sm:$0xff] %v41
  %v210 = vld.sshfl [vmem:[#allocation1] sm:$0xff pattern:$0x75316420]
  %v211 = vld.sshfl [vmem:[#allocation1 + $0x8] sm:$0xff pattern:$0x75316420]
  %212 = vrot.lane.b32.xlu0 %v210, 110
  %v213 = vpop.permute.xlu0 %212
  %214 = vrot.lane.b32.xlu0 %v211, 110
  %v215 = vpop.permute.xlu0 %214
  %v216 = vsel %vm109, %v213, %v215
  %s219 = scalar_lea.vmem [#allocation1], 1
  %220 = vst [vmem:[%s219] ss:$2 sm:$0xff] %v41
  %v221 = vld.sshfl [vmem:[#allocation1] sm:$0xff pattern:$0x75316420]
  %v222 = vld.sshfl [vmem:[#allocation1 + $0x8] sm:$0xff pattern:$0x75316420]
  %223 = vrot.lane.b32.xlu0 %v221, 96
  %v224 = vpop.permute.xlu0 %223
  %225 = vrot.lane.b32.xlu0 %v222, 96
  %v226 = vpop.permute.xlu0 %225
  %v227 = vsel %vm120, %v224, %v226
  %vm230 = vcmask 1043456
  %v231 = vsel %vm230, %v51, %v64
  %v232 = vsel %vm230, %v52, %v62
  %v233 = vsel %vm230, %v75, %v87
  %v234 = vsel %vm230, %v73, %v85
  %v235 = vsel %vm230, %v98, %v110
  %v236 = vsel %vm230, %v96, %v108
  %v237 = vsel %vm230, %v121, %v139
  %v238 = vsel %vm230, %v119, %v140
  %v239 = vsel %vm230, %v156, %v163
  %v240 = vsel %vm230, %v157, %v164
  %v241 = vsel %vm230, %v174, %v185
  %v242 = vsel %vm230, %v173, %v184
  %v243 = vsel %vm230, %v195, %v206
  %v244 = vsel %vm230, %v194, %v205
  %v245 = vsel %vm230, %v216, %v227
  %v246 = vsel %vm230, %v215, %v226
  %248 = vst [vmem:[#allocation1] ss:$2 sm:$0xff] %v41
  %s249 = scalar_lea.vmem [#allocation1], 16
  %250 = vst [vmem:[%s249] ss:$2 sm:$0xff] %v42
  %v251 = vld.sshfl [vmem:[#allocation1] sm:$0xff pattern:$0x75316420]
  %v252 = vld.sshfl [vmem:[#allocation1 + $0x8] sm:$0xff pattern:$0x75316420]
  %v253 = vld.sshfl [vmem:[#allocation1 + $0x10] sm:$0xff pattern:$0x75316420]
  %s257 = scalar_lea.vmem [#allocation1], 1
  %258 = vst [vmem:[%s257] ss:$2 sm:$0xff] %v41
  %s259 = scalar_lea.vmem [#allocation1], 17
  %260 = vst [vmem:[%s259] ss:$2 sm:$0xff] %v42
  %v261 = vld.sshfl [vmem:[#allocation1] sm:$0xff pattern:$0x75316420]
  %v262 = vld.sshfl [vmem:[#allocation1 + $0x8] sm:$0xff pattern:$0x75316420]
  %v263 = vld.sshfl [vmem:[#allocation1 + $0x10] sm:$0xff pattern:$0x75316420]
  %264 = vrot.lane.b32.xlu0 %v261, 127
  %v265 = vpop.permute.xlu0 %264
  %266 = vrot.lane.b32.xlu0 %v262, 127
  %v267 = vpop.permute.xlu0 %266
  %268 = vrot.lane.b32.xlu0 %v263, 127
  %v269 = vpop.permute.xlu0 %268
  %v270 = vsel %vm63, %v265, %v267
  %v271 = vsel %vm63, %v267, %v269
  %v275 = vsel %vm230, %v251, %v270
  %v276 = vsel %vm230, %v252, %v271
  %v277 = vsel %vm230, %v253, %v269
  %281 = vrot.lane.b32.xlu0 %v275, 95
  %v282 = vpop.permute.xlu0 %281
  %283 = vrot.lane.b32.xlu0 %v276, 95
  %v284 = vpop.permute.xlu0 %283
  %285 = vrot.lane.b32.xlu0 %v277, 95
  %v286 = vpop.permute.xlu0 %285
  %v287 = vsel %vm138, %v282, %v284
  %v288 = vsel %vm138, %v284, %v286
  %vm291 = vcmask 588800
  %v293 = vsel %vm291, %v25, 0
  %v296 = vsel %vm291, %v26, 0
  %298 = vmatpush.msra.mxu0 0.0
  %299 = vmatpush.msra.mxu0 0.0
  %300 = vmatpush.msra.mxu0 0.0
  %301 = vmatpush.msra.mxu0 0.0
  %302 = vmatpush.msra.mxu0 0.0
  %303 = vmatpush.msra.mxu0 0.0
  %304 = vmatpush.msra.mxu0 0.0
  %305 = vmatpush.msra.mxu0 %v287
  %306 = vmatpush.msra.mxu0 %v245
  %307 = vmatpush.msra.mxu0 %v243
  %308 = vmatpush.msra.mxu0 %v241
  %309 = vmatpush.msra.mxu0 %v239
  %310 = vmatpush.msra.mxu0 %v237
  %311 = vmatpush.msra.mxu0 %v235
  %312 = vmatpush.msra.mxu0 %v233
  %313 = vmatpush.msra.mxu0 %v231
  %314 = vmatmul.f32.gmra.mxu0 %v293
  %v315 = vpop.f32.mrf.mxu0
  %v316 = vadd.f32 0.0, %v315
  %317 = vmatmul.f32.gmra.mxu0 %v296
  %v318 = vpop.f32.mrf.mxu0
  %v319 = vadd.f32 0.0, %v318
  %320 = vdwg.mxu0
  %321 = vmatpush.msra.mxu0 0.0
  %322 = vmatpush.msra.mxu0 0.0
  %323 = vmatpush.msra.mxu0 0.0
  %324 = vmatpush.msra.mxu0 0.0
  %325 = vmatpush.msra.mxu0 0.0
  %326 = vmatpush.msra.mxu0 0.0
  %327 = vmatpush.msra.mxu0 0.0
  %328 = vmatpush.msra.mxu0 %v288
  %329 = vmatpush.msra.mxu0 %v246
  %330 = vmatpush.msra.mxu0 %v244
  %331 = vmatpush.msra.mxu0 %v242
  %332 = vmatpush.msra.mxu0 %v240
  %333 = vmatpush.msra.mxu0 %v238
  %334 = vmatpush.msra.mxu0 %v236
  %335 = vmatpush.msra.mxu0 %v234
  %336 = vmatpush.msra.mxu0 %v232
  %337 = vmatmul.f32.gmra.mxu0 %v293
  %v338 = vpop.f32.mrf.mxu0
  %v339 = vadd.f32 0.0, %v338
  %340 = vmatmul.f32.gmra.mxu0 %v296
  %v341 = vpop.f32.mrf.mxu0
  %v342 = vadd.f32 0.0, %v341
  %343 = vdwg.mxu0
  %v344 = vmul.f32 %v316, 1.442695
  %v345 = vpow.pop %v344
  %v346 = vmul.f32 %v339, 1.442695
  %v347 = vpow.pop %v346
  %v348 = vand.u32 2147483647, %v319
  %vm349 = vcmp.le.f32.partialorder %v348, 0.7853982
  %vm350 = vcmp.lt.s32.totalorder %v319, 0
  %v351 = vand.u32 %v319, 2139095040
  %v352 = vshrl.u32 %v351, 23
  %v353 = vsub.s32 %v352, 127
  %v354 = vand.u32 2147483647, %v319
  %v355 = vand.u32 %v354, 8388607
  %v356 = vor.u32 %v355, 8388608
  %v357 = vsub.s32 0, %v356
  %v358 = vadd.s32 %v353, 1
  %vm359 = vcmp.gt.s32.totalorder %v358, 0
  %v360 = vsel %vm359, %v358, 0
  %v361 = vshrl.u32 %v360, 5
  %v362 = vand.u32 %v360, 31
  %v363 = vsub.s32 32, %v362
  %v364 = vshrl.u32 683565275, %v363
  %v365 = vshll.u32 683565275, %v362
  %v366 = vshrl.u32 2475754826, %v363
  %v367 = vor.u32 %v365, %v366
  %v368 = vshll.u32 2475754826, %v362
  %v369 = vshrl.u32 2131351028, %v363
  %v370 = vor.u32 %v368, %v369
  %v371 = vshll.u32 2131351028, %v362
  %v372 = vshrl.u32 2102212464, %v363
  %v373 = vor.u32 %v371, %v372
  %v374 = vshll.u32 2102212464, %v362
  %v375 = vshrl.u32 920167782, %v363
  %v376 = vor.u32 %v374, %v375
  %v377 = vshll.u32 920167782, %v362
  %v378 = vshrl.u32 1326507024, %v363
  %v379 = vor.u32 %v377, %v378
  %vm380 = vcmp.lt.s32.totalorder %v361, 1
  %vm381 = vcmp.lt.s32.totalorder %v361, 2
  %vm382 = vcmp.lt.s32.totalorder %v361, 3
  %vm383 = vcmp.lt.s32.totalorder %v361, 4
  %v384 = vsel %vm380, %v364, %v367
  %v385 = vsel %vm383, %v373, 2102212464
  %v386 = vsel %vm382, %v370, %v385
  %v387 = vsel %vm381, %v384, %v386
  %v388 = vsel %vm380, %v367, %v370
  %v389 = vsel %vm383, %v376, 920167782
  %v390 = vsel %vm382, %v373, %v389
  %v391 = vsel %vm381, %v388, %v390
  %v392 = vsel %vm380, %v370, %v373
  %v393 = vsel %vm383, %v379, 1326507024
  %v394 = vsel %vm382, %v376, %v393
  %v395 = vsel %vm381, %v392, %v394
  %v396 = vshll.u32 %v356, 8
  %v397 = vand.u32 %v396, 65535
  %v398 = vshrl.u32 %v396, 16
  %v399 = vand.u32 %v395, 65535
  %v400 = vshrl.u32 %v395, 16
  %v401 = vmul.u32 %v397, %v399
  %v402 = vmul.u32 %v397, %v400
  %v403 = vmul.u32 %v398, %v399
  %v404 = vmul.u32 %v398, %v400
  %v405 = vshll.u32 %v402, 16
  %v406 = vshrl.u32 %v402, 16
  %v407 = vshll.u32 %v403, 16
  %v408 = vshrl.u32 %v403, 16
  %vm409 = vc.u32 %v401, %v405
  %v410 = vsel %vm409, 1, 0
  %v411 = vadd.s32 %v401, %v405
  %v412 = vadd.s32 %v404, %v410
  %vm413 = vc.u32 %v411, %v407
  %v414 = vsel %vm413, 1, 0
  %v415 = vadd.s32 %v411, %v407
  %v416 = vadd.s32 %v412, %v414
  %v417 = vadd.s32 %v416, %v406
  %v418 = vadd.s32 %v417, %v408
  %v419 = vand.u32 %v396, 65535
  %v420 = vshrl.u32 %v396, 16
  %v421 = vand.u32 %v391, 65535
  %v422 = vshrl.u32 %v391, 16
  %v423 = vmul.u32 %v419, %v421
  %v424 = vmul.u32 %v419, %v422
  %v425 = vmul.u32 %v420, %v421
  %v426 = vmul.u32 %v420, %v422
  %v427 = vshll.u32 %v424, 16
  %v428 = vshrl.u32 %v424, 16
  %v429 = vshll.u32 %v425, 16
  %v430 = vshrl.u32 %v425, 16
  %vm431 = vc.u32 %v423, %v427
  %v432 = vsel %vm431, 1, 0
  %v433 = vadd.s32 %v423, %v427
  %v434 = vadd.s32 %v426, %v432
  %vm435 = vc.u32 %v433, %v429
  %v436 = vsel %vm435, 1, 0
  %v437 = vadd.s32 %v433, %v429
  %v438 = vadd.s32 %v434, %v436
  %v439 = vadd.s32 %v438, %v428
  %v440 = vadd.s32 %v439, %v430
  %v441 = vmul.u32 %v396, %v387
  %v442 = vadd.s32 %v418, %v437
  %vm443 = vc.u32 %v418, %v437
  %v444 = vadd.s32 %v440, 1
  %v445 = vsel %vm443, %v444, %v440
  %v446 = vadd.s32 %v441, %v445
  %v447 = vadd.s32 %v446, 536870912
  %v448 = vshrl.u32 %v447, 30
  %v449 = vshll.u32 %v448, 30
  %v450 = vsub.s32 %v446, %v449
  %vm451 = vcmp.lt.s32.totalorder %v450, 0
  %v452 = vsub.s32 0, %v450
  %v453 = vsel %vm451, %v452, %v450
  %v454 = vclz %v453
  %v455 = vsub.s32 %v454, 2
  %vm456 = vcmp.gt.s32.totalorder 0, %v455
  %v457 = vsel %vm456, 0, %v455
  %v458 = vsub.s32 32, %v457
  %v459 = vshll.u32 %v450, %v457
  %v460 = vshrl.u32 %v442, %v458
  %v461 = vor.u32 %v459, %v460
  %v462 = vsub.s32 4294967266, %v457
  %v463 = vadd.s32 %v462, 127
  %v464 = vshll.u32 %v463, 23
  %v465 = vor.u32 4788187, %v464
  %v466 = vand.u32 2147483647, %v465
  %v468 = vcvt.s32.f32 %v461
  %v469 = vmul.f32 %v468, %v466
  %v470 = vxor.u32 %v469, 2147483648
  %v471 = vsel %vm350, %v470, %v469
  %v472 = vsub.s32 4, %v448
  %v473 = vsel %vm350, %v472, %v448
  %v474 = vsel %vm349, %v319, %v471
  %v475 = vsel %vm349, 0, %v473
  %v476 = vmul.f32 %v474, %v474
  %v477 = vmul.f32 %v476, -0.001358992
  %v478 = vadd.f32 %v477, 0.041655596
  %v479 = vmul.f32 %v476, %v478
  %v480 = vadd.f32 %v479, -0.4999988
  %v481 = vmul.f32 %v476, %v480
  %v482 = vadd.f32 1.0, %v481
  %v483 = vmul.f32 %v474, %v474
  %v484 = vmul.f32 %v483, -0.00019511016
  %v485 = vadd.f32 %v484, 0.008332121
  %v486 = vmul.f32 %v483, %v485
  %v487 = vadd.f32 %v486, -0.16666654
  %v488 = vmul.f32 %v483, %v487
  %v489 = vadd.f32 %v488, 1.0
  %v490 = vmul.f32 %v489, %v474
  %vm491 = vweird.f32 %v319
  %v492 = vand.u32 %v475, 3
  %vm493 = vcmp.lt.s32.totalorder %v492, 2
  %vm494 = vcmp.eq.s32.totalorder %v492, 0
  %v495 = vxor.u32 %v490, 2147483648
  %v496 = vsel %vm494, %v482, %v495
  %vm497 = vcmp.eq.s32.totalorder %v492, 2
  %v498 = vxor.u32 %v482, 2147483648
  %v499 = vsel %vm497, %v498, %v490
  %v500 = vsel %vm493, %v496, %v499
  %v501 = vsel %vm491, nan, %v500
  %v502 = vand.u32 2147483647, %v342
  %vm503 = vcmp.le.f32.partialorder %v502, 0.7853982
  %vm504 = vcmp.lt.s32.totalorder %v342, 0
  %v505 = vand.u32 %v342, 2139095040
  %v506 = vshrl.u32 %v505, 23
  %v507 = vsub.s32 %v506, 127
  %v508 = vand.u32 2147483647, %v342
  %v509 = vand.u32 %v508, 8388607
  %v510 = vor.u32 %v509, 8388608
  %v511 = vsub.s32 0, %v510
  %v512 = vadd.s32 %v507, 1
  %vm513 = vcmp.gt.s32.totalorder %v512, 0
  %v514 = vsel %vm513, %v512, 0
  %v515 = vshrl.u32 %v514, 5
  %v516 = vand.u32 %v514, 31
  %v517 = vsub.s32 32, %v516
  %v518 = vshrl.u32 683565275, %v517
  %v519 = vshll.u32 683565275, %v516
  %v520 = vshrl.u32 2475754826, %v517
  %v521 = vor.u32 %v519, %v520
  %v522 = vshll.u32 2475754826, %v516
  %v523 = vshrl.u32 2131351028, %v517
  %v524 = vor.u32 %v522, %v523
  %v525 = vshll.u32 2131351028, %v516
  %v526 = vshrl.u32 2102212464, %v517
  %v527 = vor.u32 %v525, %v526
  %v528 = vshll.u32 2102212464, %v516
  %v529 = vshrl.u32 920167782, %v517
  %v530 = vor.u32 %v528, %v529
  %v531 = vshll.u32 920167782, %v516
  %v532 = vshrl.u32 1326507024, %v517
  %v533 = vor.u32 %v531, %v532
  %vm534 = vcmp.lt.s32.totalorder %v515, 1
  %vm535 = vcmp.lt.s32.totalorder %v515, 2
  %vm536 = vcmp.lt.s32.totalorder %v515, 3
  %vm537 = vcmp.lt.s32.totalorder %v515, 4
  %v538 = vsel %vm534, %v518, %v521
  %v539 = vsel %vm537, %v527, 2102212464
  %v540 = vsel %vm536, %v524, %v539
  %v541 = vsel %vm535, %v538, %v540
  %v542 = vsel %vm534, %v521, %v524
  %v543 = vsel %vm537, %v530, 920167782
  %v544 = vsel %vm536, %v527, %v543
  %v545 = vsel %vm535, %v542, %v544
  %v546 = vsel %vm534, %v524, %v527
  %v547 = vsel %vm537, %v533, 1326507024
  %v548 = vsel %vm536, %v530, %v547
  %v549 = vsel %vm535, %v546, %v548
  %v550 = vshll.u32 %v510, 8
  %v551 = vand.u32 %v550, 65535
  %v552 = vshrl.u32 %v550, 16
  %v553 = vand.u32 %v549, 65535
  %v554 = vshrl.u32 %v549, 16
  %v555 = vmul.u32 %v551, %v553
  %v556 = vmul.u32 %v551, %v554
  %v557 = vmul.u32 %v552, %v553
  %v558 = vmul.u32 %v552, %v554
  %v559 = vshll.u32 %v556, 16
  %v560 = vshrl.u32 %v556, 16
  %v561 = vshll.u32 %v557, 16
  %v562 = vshrl.u32 %v557, 16
  %vm563 = vc.u32 %v555, %v559
  %v564 = vsel %vm563, 1, 0
  %v565 = vadd.s32 %v555, %v559
  %v566 = vadd.s32 %v558, %v564
  %vm567 = vc.u32 %v565, %v561
  %v568 = vsel %vm567, 1, 0
  %v569 = vadd.s32 %v565, %v561
  %v570 = vadd.s32 %v566, %v568
  %v571 = vadd.s32 %v570, %v560
  %v572 = vadd.s32 %v571, %v562
  %v573 = vand.u32 %v550, 65535
  %v574 = vshrl.u32 %v550, 16
  %v575 = vand.u32 %v545, 65535
  %v576 = vshrl.u32 %v545, 16
  %v577 = vmul.u32 %v573, %v575
  %v578 = vmul.u32 %v573, %v576
  %v579 = vmul.u32 %v574, %v575
  %v580 = vmul.u32 %v574, %v576
  %v581 = vshll.u32 %v578, 16
  %v582 = vshrl.u32 %v578, 16
  %v583 = vshll.u32 %v579, 16
  %v584 = vshrl.u32 %v579, 16
  %vm585 = vc.u32 %v577, %v581
  %v586 = vsel %vm585, 1, 0
  %v587 = vadd.s32 %v577, %v581
  %v588 = vadd.s32 %v580, %v586
  %vm589 = vc.u32 %v587, %v583
  %v590 = vsel %vm589, 1, 0
  %v591 = vadd.s32 %v587, %v583
  %v592 = vadd.s32 %v588, %v590
  %v593 = vadd.s32 %v592, %v582
  %v594 = vadd.s32 %v593, %v584
  %v595 = vmul.u32 %v550, %v541
  %v596 = vadd.s32 %v572, %v591
  %vm597 = vc.u32 %v572, %v591
  %v598 = vadd.s32 %v594, 1
  %v599 = vsel %vm597, %v598, %v594
  %v600 = vadd.s32 %v595, %v599
  %v601 = vadd.s32 %v600, 536870912
  %v602 = vshrl.u32 %v601, 30
  %v603 = vshll.u32 %v602, 30
  %v604 = vsub.s32 %v600, %v603
  %vm605 = vcmp.lt.s32.totalorder %v604, 0
  %v606 = vsub.s32 0, %v604
  %v607 = vsel %vm605, %v606, %v604
  %v608 = vclz %v607
  %v609 = vsub.s32 %v608, 2
  %vm610 = vcmp.gt.s32.totalorder 0, %v609
  %v611 = vsel %vm610, 0, %v609
  %v612 = vsub.s32 32, %v611
  %v613 = vshll.u32 %v604, %v611
  %v614 = vshrl.u32 %v596, %v612
  %v615 = vor.u32 %v613, %v614
  %v616 = vsub.s32 4294967266, %v611
  %v617 = vadd.s32 %v616, 127
  %v618 = vshll.u32 %v617, 23
  %v619 = vor.u32 4788187, %v618
  %v620 = vand.u32 2147483647, %v619
  %v622 = vcvt.s32.f32 %v615
  %v623 = vmul.f32 %v622, %v620
  %v624 = vxor.u32 %v623, 2147483648
  %v625 = vsel %vm504, %v624, %v623
  %v626 = vsub.s32 4, %v602
  %v627 = vsel %vm504, %v626, %v602
  %v628 = vsel %vm503, %v342, %v625
  %v629 = vsel %vm503, 0, %v627
  %v630 = vmul.f32 %v628, %v628
  %v631 = vmul.f32 %v630, -0.001358992
  %v632 = vadd.f32 %v631, 0.041655596
  %v633 = vmul.f32 %v630, %v632
  %v634 = vadd.f32 %v633, -0.4999988
  %v635 = vmul.f32 %v630, %v634
  %v636 = vadd.f32 1.0, %v635
  %v637 = vmul.f32 %v628, %v628
  %v638 = vmul.f32 %v637, -0.00019511016
  %v639 = vadd.f32 %v638, 0.008332121
  %v640 = vmul.f32 %v637, %v639
  %v641 = vadd.f32 %v640, -0.16666654
  %v642 = vmul.f32 %v637, %v641
  %v643 = vadd.f32 %v642, 1.0
  %v644 = vmul.f32 %v643, %v628
  %vm645 = vweird.f32 %v342
  %v646 = vand.u32 %v629, 3
  %vm647 = vcmp.lt.s32.totalorder %v646, 2
  %vm648 = vcmp.eq.s32.totalorder %v646, 0
  %v649 = vxor.u32 %v644, 2147483648
  %v650 = vsel %vm648, %v636, %v649
  %vm651 = vcmp.eq.s32.totalorder %v646, 2
  %v652 = vxor.u32 %v636, 2147483648
  %v653 = vsel %vm651, %v652, %v644
  %v654 = vsel %vm647, %v650, %v653
  %v655 = vsel %vm645, nan, %v654
  %v656 = vmul.f32 %v345, %v501
  %v657 = vmul.f32 %v347, %v655
  %658 = vst [vmem:[%s6] sm:$0xff] %v656
  %659 = vst.msk [vmem:[%s6 + $0x8] sm:$0xff] %vm120, %v657
  %v660 = vand.u32 2147483647, %v319
  %vm661 = vcmp.le.f32.partialorder %v660, 0.7853982
  %vm662 = vcmp.lt.s32.totalorder %v319, 0
  %v663 = vand.u32 %v319, 2139095040
  %v664 = vshrl.u32 %v663, 23
  %v665 = vsub.s32 %v664, 127
  %v666 = vand.u32 2147483647, %v319
  %v667 = vand.u32 %v666, 8388607
  %v668 = vor.u32 %v667, 8388608
  %v669 = vsub.s32 0, %v668
  %v670 = vadd.s32 %v665, 1
  %vm671 = vcmp.gt.s32.totalorder %v670, 0
  %v672 = vsel %vm671, %v670, 0
  %v673 = vshrl.u32 %v672, 5
  %v674 = vand.u32 %v672, 31
  %v675 = vsub.s32 32, %v674
  %v676 = vshrl.u32 683565275, %v675
  %v677 = vshll.u32 683565275, %v674
  %v678 = vshrl.u32 2475754826, %v675
  %v679 = vor.u32 %v677, %v678
  %v680 = vshll.u32 2475754826, %v674
  %v681 = vshrl.u32 2131351028, %v675
  %v682 = vor.u32 %v680, %v681
  %v683 = vshll.u32 2131351028, %v674
  %v684 = vshrl.u32 2102212464, %v675
  %v685 = vor.u32 %v683, %v684
  %v686 = vshll.u32 2102212464, %v674
  %v687 = vshrl.u32 920167782, %v675
  %v688 = vor.u32 %v686, %v687
  %v689 = vshll.u32 920167782, %v674
  %v690 = vshrl.u32 1326507024, %v675
  %v691 = vor.u32 %v689, %v690
  %vm692 = vcmp.lt.s32.totalorder %v673, 1
  %vm693 = vcmp.lt.s32.totalorder %v673, 2
  %vm694 = vcmp.lt.s32.totalorder %v673, 3
  %vm695 = vcmp.lt.s32.totalorder %v673, 4
  %v696 = vsel %vm692, %v676, %v679
  %v697 = vsel %vm695, %v685, 2102212464
  %v698 = vsel %vm694, %v682, %v697
  %v699 = vsel %vm693, %v696, %v698
  %v700 = vsel %vm692, %v679, %v682
  %v701 = vsel %vm695, %v688, 920167782
  %v702 = vsel %vm694, %v685, %v701
  %v703 = vsel %vm693, %v700, %v702
  %v704 = vsel %vm692, %v682, %v685
  %v705 = vsel %vm695, %v691, 1326507024
  %v706 = vsel %vm694, %v688, %v705
  %v707 = vsel %vm693, %v704, %v706
  %v708 = vshll.u32 %v668, 8
  %v709 = vand.u32 %v708, 65535
  %v710 = vshrl.u32 %v708, 16
  %v711 = vand.u32 %v707, 65535
  %v712 = vshrl.u32 %v707, 16
  %v713 = vmul.u32 %v709, %v711
  %v714 = vmul.u32 %v709, %v712
  %v715 = vmul.u32 %v710, %v711
  %v716 = vmul.u32 %v710, %v712
  %v717 = vshll.u32 %v714, 16
  %v718 = vshrl.u32 %v714, 16
  %v719 = vshll.u32 %v715, 16
  %v720 = vshrl.u32 %v715, 16
  %vm721 = vc.u32 %v713, %v717
  %v722 = vsel %vm721, 1, 0
  %v723 = vadd.s32 %v713, %v717
  %v724 = vadd.s32 %v716, %v722
  %vm725 = vc.u32 %v723, %v719
  %v726 = vsel %vm725, 1, 0
  %v727 = vadd.s32 %v723, %v719
  %v728 = vadd.s32 %v724, %v726
  %v729 = vadd.s32 %v728, %v718
  %v730 = vadd.s32 %v729, %v720
  %v731 = vand.u32 %v708, 65535
  %v732 = vshrl.u32 %v708, 16
  %v733 = vand.u32 %v703, 65535
  %v734 = vshrl.u32 %v703, 16
  %v735 = vmul.u32 %v731, %v733
  %v736 = vmul.u32 %v731, %v734
  %v737 = vmul.u32 %v732, %v733
  %v738 = vmul.u32 %v732, %v734
  %v739 = vshll.u32 %v736, 16
  %v740 = vshrl.u32 %v736, 16
  %v741 = vshll.u32 %v737, 16
  %v742 = vshrl.u32 %v737, 16
  %vm743 = vc.u32 %v735, %v739
  %v744 = vsel %vm743, 1, 0
  %v745 = vadd.s32 %v735, %v739
  %v746 = vadd.s32 %v738, %v744
  %vm747 = vc.u32 %v745, %v741
  %v748 = vsel %vm747, 1, 0
  %v749 = vadd.s32 %v745, %v741
  %v750 = vadd.s32 %v746, %v748
  %v751 = vadd.s32 %v750, %v740
  %v752 = vadd.s32 %v751, %v742
  %v753 = vmul.u32 %v708, %v699
  %v754 = vadd.s32 %v730, %v749
  %vm755 = vc.u32 %v730, %v749
  %v756 = vadd.s32 %v752, 1
  %v757 = vsel %vm755, %v756, %v752
  %v758 = vadd.s32 %v753, %v757
  %v759 = vadd.s32 %v758, 536870912
  %v760 = vshrl.u32 %v759, 30
  %v761 = vshll.u32 %v760, 30
  %v762 = vsub.s32 %v758, %v761
  %vm763 = vcmp.lt.s32.totalorder %v762, 0
  %v764 = vsub.s32 0, %v762
  %v765 = vsel %vm763, %v764, %v762
  %v766 = vclz %v765
  %v767 = vsub.s32 %v766, 2
  %vm768 = vcmp.gt.s32.totalorder 0, %v767
  %v769 = vsel %vm768, 0, %v767
  %v770 = vsub.s32 32, %v769
  %v771 = vshll.u32 %v762, %v769
  %v772 = vshrl.u32 %v754, %v770
  %v773 = vor.u32 %v771, %v772
  %v774 = vsub.s32 4294967266, %v769
  %v775 = vadd.s32 %v774, 127
  %v776 = vshll.u32 %v775, 23
  %v777 = vor.u32 4788187, %v776
  %v778 = vand.u32 2147483647, %v777
  %v780 = vcvt.s32.f32 %v773
  %v781 = vmul.f32 %v780, %v778
  %v782 = vxor.u32 %v781, 2147483648
  %v783 = vsel %vm662, %v782, %v781
  %v784 = vsub.s32 4, %v760
  %v785 = vsel %vm662, %v784, %v760
  %v786 = vsel %vm661, %v319, %v783
  %v787 = vsel %vm661, 0, %v785
  %v788 = vmul.f32 %v786, %v786
  %v789 = vmul.f32 %v788, -0.001358992
  %v790 = vadd.f32 %v789, 0.041655596
  %v791 = vmul.f32 %v788, %v790
  %v792 = vadd.f32 %v791, -0.4999988
  %v793 = vmul.f32 %v788, %v792
  %v794 = vadd.f32 1.0, %v793
  %v795 = vmul.f32 %v786, %v786
  %v796 = vmul.f32 %v795, -0.00019511016
  %v797 = vadd.f32 %v796, 0.008332121
  %v798 = vmul.f32 %v795, %v797
  %v799 = vadd.f32 %v798, -0.16666654
  %v800 = vmul.f32 %v795, %v799
  %v801 = vadd.f32 %v800, 1.0
  %v802 = vmul.f32 %v801, %v786
  %vm803 = vweird.f32 %v319
  %v804 = vadd.s32 %v787, 3
  %v805 = vand.u32 %v804, 3
  %vm806 = vcmp.lt.s32.totalorder %v805, 2
  %vm807 = vcmp.eq.s32.totalorder %v805, 0
  %v808 = vxor.u32 %v802, 2147483648
  %v809 = vsel %vm807, %v794, %v808
  %vm810 = vcmp.eq.s32.totalorder %v805, 2
  %v811 = vxor.u32 %v794, 2147483648
  %v812 = vsel %vm810, %v811, %v802
  %v813 = vsel %vm806, %v809, %v812
  %v814 = vsel %vm803, nan, %v813
  %v815 = vand.u32 2147483647, %v342
  %vm816 = vcmp.le.f32.partialorder %v815, 0.7853982
  %vm817 = vcmp.lt.s32.totalorder %v342, 0
  %v818 = vand.u32 %v342, 2139095040
  %v819 = vshrl.u32 %v818, 23
  %v820 = vsub.s32 %v819, 127
  %v821 = vand.u32 2147483647, %v342
  %v822 = vand.u32 %v821, 8388607
  %v823 = vor.u32 %v822, 8388608
  %v824 = vsub.s32 0, %v823
  %v825 = vadd.s32 %v820, 1
  %vm826 = vcmp.gt.s32.totalorder %v825, 0
  %v827 = vsel %vm826, %v825, 0
  %v828 = vshrl.u32 %v827, 5
  %v829 = vand.u32 %v827, 31
  %v830 = vsub.s32 32, %v829
  %v831 = vshrl.u32 683565275, %v830
  %v832 = vshll.u32 683565275, %v829
  %v833 = vshrl.u32 2475754826, %v830
  %v834 = vor.u32 %v832, %v833
  %v835 = vshll.u32 2475754826, %v829
  %v836 = vshrl.u32 2131351028, %v830
  %v837 = vor.u32 %v835, %v836
  %v838 = vshll.u32 2131351028, %v829
  %v839 = vshrl.u32 2102212464, %v830
  %v840 = vor.u32 %v838, %v839
  %v841 = vshll.u32 2102212464, %v829
  %v842 = vshrl.u32 920167782, %v830
  %v843 = vor.u32 %v841, %v842
  %v844 = vshll.u32 920167782, %v829
  %v845 = vshrl.u32 1326507024, %v830
  %v846 = vor.u32 %v844, %v845
  %vm847 = vcmp.lt.s32.totalorder %v828, 1
  %vm848 = vcmp.lt.s32.totalorder %v828, 2
  %vm849 = vcmp.lt.s32.totalorder %v828, 3
  %vm850 = vcmp.lt.s32.totalorder %v828, 4
  %v851 = vsel %vm847, %v831, %v834
  %v852 = vsel %vm850, %v840, 2102212464
  %v853 = vsel %vm849, %v837, %v852
  %v854 = vsel %vm848, %v851, %v853
  %v855 = vsel %vm847, %v834, %v837
  %v856 = vsel %vm850, %v843, 920167782
  %v857 = vsel %vm849, %v840, %v856
  %v858 = vsel %vm848, %v855, %v857
  %v859 = vsel %vm847, %v837, %v840
  %v860 = vsel %vm850, %v846, 1326507024
  %v861 = vsel %vm849, %v843, %v860
  %v862 = vsel %vm848, %v859, %v861
  %v863 = vshll.u32 %v823, 8
  %v864 = vand.u32 %v863, 65535
  %v865 = vshrl.u32 %v863, 16
  %v866 = vand.u32 %v862, 65535
  %v867 = vshrl.u32 %v862, 16
  %v868 = vmul.u32 %v864, %v866
  %v869 = vmul.u32 %v864, %v867
  %v870 = vmul.u32 %v865, %v866
  %v871 = vmul.u32 %v865, %v867
  %v872 = vshll.u32 %v869, 16
  %v873 = vshrl.u32 %v869, 16
  %v874 = vshll.u32 %v870, 16
  %v875 = vshrl.u32 %v870, 16
  %vm876 = vc.u32 %v868, %v872
  %v877 = vsel %vm876, 1, 0
  %v878 = vadd.s32 %v868, %v872
  %v879 = vadd.s32 %v871, %v877
  %vm880 = vc.u32 %v878, %v874
  %v881 = vsel %vm880, 1, 0
  %v882 = vadd.s32 %v878, %v874
  %v883 = vadd.s32 %v879, %v881
  %v884 = vadd.s32 %v883, %v873
  %v885 = vadd.s32 %v884, %v875
  %v886 = vand.u32 %v863, 65535
  %v887 = vshrl.u32 %v863, 16
  %v888 = vand.u32 %v858, 65535
  %v889 = vshrl.u32 %v858, 16
  %v890 = vmul.u32 %v886, %v888
  %v891 = vmul.u32 %v886, %v889
  %v892 = vmul.u32 %v887, %v888
  %v893 = vmul.u32 %v887, %v889
  %v894 = vshll.u32 %v891, 16
  %v895 = vshrl.u32 %v891, 16
  %v896 = vshll.u32 %v892, 16
  %v897 = vshrl.u32 %v892, 16
  %vm898 = vc.u32 %v890, %v894
  %v899 = vsel %vm898, 1, 0
  %v900 = vadd.s32 %v890, %v894
  %v901 = vadd.s32 %v893, %v899
  %vm902 = vc.u32 %v900, %v896
  %v903 = vsel %vm902, 1, 0
  %v904 = vadd.s32 %v900, %v896
  %v905 = vadd.s32 %v901, %v903
  %v906 = vadd.s32 %v905, %v895
  %v907 = vadd.s32 %v906, %v897
  %v908 = vmul.u32 %v863, %v854
  %v909 = vadd.s32 %v885, %v904
  %vm910 = vc.u32 %v885, %v904
  %v911 = vadd.s32 %v907, 1
  %v912 = vsel %vm910, %v911, %v907
  %v913 = vadd.s32 %v908, %v912
  %v914 = vadd.s32 %v913, 536870912
  %v915 = vshrl.u32 %v914, 30
  %v916 = vshll.u32 %v915, 30
  %v917 = vsub.s32 %v913, %v916
  %vm918 = vcmp.lt.s32.totalorder %v917, 0
  %v919 = vsub.s32 0, %v917
  %v920 = vsel %vm918, %v919, %v917
  %v921 = vclz %v920
  %v922 = vsub.s32 %v921, 2
  %vm923 = vcmp.gt.s32.totalorder 0, %v922
  %v924 = vsel %vm923, 0, %v922
  %v925 = vsub.s32 32, %v924
  %v926 = vshll.u32 %v917, %v924
  %v927 = vshrl.u32 %v909, %v925
  %v928 = vor.u32 %v926, %v927
  %v929 = vsub.s32 4294967266, %v924
  %v930 = vadd.s32 %v929, 127
  %v931 = vshll.u32 %v930, 23
  %v932 = vor.u32 4788187, %v931
  %v933 = vand.u32 2147483647, %v932
  %v935 = vcvt.s32.f32 %v928
  %v936 = vmul.f32 %v935, %v933
  %v937 = vxor.u32 %v936, 2147483648
  %v938 = vsel %vm817, %v937, %v936
  %v939 = vsub.s32 4, %v915
  %v940 = vsel %vm817, %v939, %v915
  %v941 = vsel %vm816, %v342, %v938
  %v942 = vsel %vm816, 0, %v940
  %v943 = vmul.f32 %v941, %v941
  %v944 = vmul.f32 %v943, -0.001358992
  %v945 = vadd.f32 %v944, 0.041655596
  %v946 = vmul.f32 %v943, %v945
  %v947 = vadd.f32 %v946, -0.4999988
  %v948 = vmul.f32 %v943, %v947
  %v949 = vadd.f32 1.0, %v948
  %v950 = vmul.f32 %v941, %v941
  %v951 = vmul.f32 %v950, -0.00019511016
  %v952 = vadd.f32 %v951, 0.008332121
  %v953 = vmul.f32 %v950, %v952
  %v954 = vadd.f32 %v953, -0.16666654
  %v955 = vmul.f32 %v950, %v954
  %v956 = vadd.f32 %v955, 1.0
  %v957 = vmul.f32 %v956, %v941
  %vm958 = vweird.f32 %v342
  %v959 = vadd.s32 %v942, 3
  %v960 = vand.u32 %v959, 3
  %vm961 = vcmp.lt.s32.totalorder %v960, 2
  %vm962 = vcmp.eq.s32.totalorder %v960, 0
  %v963 = vxor.u32 %v957, 2147483648
  %v964 = vsel %vm962, %v949, %v963
  %vm965 = vcmp.eq.s32.totalorder %v960, 2
  %v966 = vxor.u32 %v949, 2147483648
  %v967 = vsel %vm965, %v966, %v957
  %v968 = vsel %vm961, %v964, %v967
  %v969 = vsel %vm958, nan, %v968
  %v970 = vmul.f32 %v345, %v814
  %v971 = vmul.f32 %v347, %v969
  %972 = vst [vmem:[%s7] sm:$0xff] %v970
  %973 = vst.msk [vmem:[%s7 + $0x8] sm:$0xff] %vm120, %v971
  %s974 = scalar_lea.vmem %s0, 12
  %v975 = vld [vmem:[%s974] sm:$0xff]
  %v976 = vld [vmem:[%s974 + $0x8] sm:$0xf]
  %v977 = vmul.f32 %v27, %v975
  %v978 = vmul.f32 %v28, %v976
  %v979 = vadd.f32 %v977, %v29
  %v980 = vadd.f32 %v978, %v30
  %s981 = scalar_lea.vmem %s1, 12
  %v982 = vld [vmem:[%s981] sm:$0xff]
  %v983 = vld [vmem:[%s981 + $0x8] sm:$0xf]
  %v984 = vmul.f32 %v31, %v982
  %v985 = vmul.f32 %v32, %v983
  %v986 = vadd.f32 %v979, 1e-05
  %v987 = vadd.f32 %v980, 1e-05
  %v988 = vlog2.pop %v986
  %v989 = vmul.f32 %v988, 0.6931472
  %v990 = vlog2.pop %v987
  %v991 = vmul.f32 %v990, 0.6931472
  %993 = vst [vmem:[#allocation1] ss:$2 sm:$0xff] %v989
  %v994 = vld.sshfl [vmem:[#allocation1] sm:$0xff pattern:$0x75316420]
  %v995 = vld.sshfl [vmem:[#allocation1 + $0x8] sm:$0xff pattern:$0x75316420]
  %s998 = scalar_lea.vmem [#allocation1], 1
  %999 = vst [vmem:[%s998] ss:$2 sm:$0xff] %v989
  %v1000 = vld.sshfl [vmem:[#allocation1] sm:$0xff pattern:$0x75316420]
  %v1001 = vld.sshfl [vmem:[#allocation1 + $0x8] sm:$0xff pattern:$0x75316420]
  %1002 = vrot.lane.b32.xlu0 %v1000, 127
  %v1003 = vpop.permute.xlu0 %1002
  %1004 = vrot.lane.b32.xlu0 %v1001, 127
  %v1005 = vpop.permute.xlu0 %1004
  %v1006 = vsel %vm63, %v1003, %v1005
  %1009 = vst [vmem:[#allocation1] ss:$2 sm:$0xff] %v989
  %v1010 = vld.sshfl [vmem:[#allocation1] sm:$0xff pattern:$0x75316420]
  %v1011 = vld.sshfl [vmem:[#allocation1 + $0x8] sm:$0xff pattern:$0x75316420]
  %1012 = vrot.lane.b32.xlu0 %v1010, 126
  %v1013 = vpop.permute.xlu0 %1012
  %1014 = vrot.lane.b32.xlu0 %v1011, 126
  %v1015 = vpop.permute.xlu0 %1014
  %v1016 = vsel %vm74, %v1013, %v1015
  %s1019 = scalar_lea.vmem [#allocation1], 1
  %1020 = vst [vmem:[%s1019] ss:$2 sm:$0xff] %v989
  %v1021 = vld.sshfl [vmem:[#allocation1] sm:$0xff pattern:$0x75316420]
  %v1022 = vld.sshfl [vmem:[#allocation1 + $0x8] sm:$0xff pattern:$0x75316420]
  %1023 = vrot.lane.b32.xlu0 %v1021, 112
  %v1024 = vpop.permute.xlu0 %1023
  %1025 = vrot.lane.b32.xlu0 %v1022, 112
  %v1026 = vpop.permute.xlu0 %1025
  %v1027 = vsel %vm86, %v1024, %v1026
  %1030 = vst [vmem:[#allocation1] ss:$2 sm:$0xff] %v989
  %v1031 = vld.sshfl [vmem:[#allocation1] sm:$0xff pattern:$0x75316420]
  %v1032 = vld.sshfl [vmem:[#allocation1 + $0x8] sm:$0xff pattern:$0x75316420]
  %1033 = vrot.lane.b32.xlu0 %v1031, 111
  %v1034 = vpop.permute.xlu0 %1033
  %1035 = vrot.lane.b32.xlu0 %v1032, 111
  %v1036 = vpop.permute.xlu0 %1035
  %v1037 = vsel %vm97, %v1034, %v1036
  %s1040 = scalar_lea.vmem [#allocation1], 1
  %1041 = vst [vmem:[%s1040] ss:$2 sm:$0xff] %v989
  %v1042 = vld.sshfl [vmem:[#allocation1] sm:$0xff pattern:$0x75316420]
  %v1043 = vld.sshfl [vmem:[#allocation1 + $0x8] sm:$0xff pattern:$0x75316420]
  %1044 = vrot.lane.b32.xlu0 %v1042, 110
  %v1045 = vpop.permute.xlu0 %1044
  %1046 = vrot.lane.b32.xlu0 %v1043, 110
  %v1047 = vpop.permute.xlu0 %1046
  %v1048 = vsel %vm109, %v1045, %v1047
  %1051 = vst [vmem:[#allocation1] ss:$2 sm:$0xff] %v989
  %v1052 = vld.sshfl [vmem:[#allocation1] sm:$0xff pattern:$0x75316420]
  %v1053 = vld.sshfl [vmem:[#allocation1 + $0x8] sm:$0xff pattern:$0x75316420]
  %1054 = vrot.lane.b32.xlu0 %v1052, 96
  %v1055 = vpop.permute.xlu0 %1054
  %1056 = vrot.lane.b32.xlu0 %v1053, 96
  %v1057 = vpop.permute.xlu0 %1056
  %v1058 = vsel %vm120, %v1055, %v1057
  %s1062 = scalar_lea.vmem [#allocation1], 1
  %1063 = vst [vmem:[%s1062] ss:$2 sm:$0xff] %v989
  %s1064 = scalar_lea.vmem [#allocation1], 17
  %1065 = vst [vmem:[%s1064] ss:$2 sm:$0xff] %v991
  %v1066 = vld.sshfl [vmem:[#allocation1] sm:$0xff pattern:$0x75316420]
  %v1067 = vld.sshfl [vmem:[#allocation1 + $0x8] sm:$0xff pattern:$0x75316420]
  %v1068 = vld.sshfl [vmem:[#allocation1 + $0x10] sm:$0xff pattern:$0x75316420]
  %1069 = vrot.lane.b32.xlu0 %v1066, 95
  %v1070 = vpop.permute.xlu0 %1069
  %1071 = vrot.lane.b32.xlu0 %v1067, 95
  %v1072 = vpop.permute.xlu0 %1071
  %1073 = vrot.lane.b32.xlu0 %v1068, 95
  %v1074 = vpop.permute.xlu0 %1073
  %v1075 = vsel %vm138, %v1070, %v1072
  %v1076 = vsel %vm138, %v1072, %v1074
  %1079 = vst [vmem:[#allocation1] ss:$2 sm:$0xff] %v989
  %s1080 = scalar_lea.vmem [#allocation1], 16
  %1081 = vst [vmem:[%s1080] ss:$2 sm:$0xff] %v991
  %v1082 = vld.sshfl [vmem:[#allocation1] sm:$0xff pattern:$0x75316420]
  %v1083 = vld.sshfl [vmem:[#allocation1 + $0x8] sm:$0xff pattern:$0x75316420]
  %v1084 = vld.sshfl [vmem:[#allocation1 + $0x10] sm:$0xff pattern:$0x75316420]
  %1085 = vrot.lane.b32.xlu0 %v1082, 94
  %v1086 = vpop.permute.xlu0 %1085
  %1087 = vrot.lane.b32.xlu0 %v1083, 94
  %v1088 = vpop.permute.xlu0 %1087
  %1089 = vrot.lane.b32.xlu0 %v1084, 94
  %v1090 = vpop.permute.xlu0 %1089
  %v1091 = vsel %vm155, %v1086, %v1088
  %v1092 = vsel %vm155, %v1088, %v1090
  %s1096 = scalar_lea.vmem [#allocation1], 1
  %1097 = vst [vmem:[%s1096] ss:$2 sm:$0xff] %v984
  %v1098 = vld.sshfl [vmem:[#allocation1] sm:$0xff pattern:$0x75316420]
  %v1099 = vld.sshfl [vmem:[#allocation1 + $0x8] sm:$0xff pattern:$0x75316420]
  %1102 = vst [vmem:[#allocation1] ss:$2 sm:$0xff] %v984
  %v1103 = vld.sshfl [vmem:[#allocation1] sm:$0xff pattern:$0x75316420]
  %v1104 = vld.sshfl [vmem:[#allocation1 + $0x8] sm:$0xff pattern:$0x75316420]
  %1105 = vrot.lane.b32.xlu0 %v1103, 127
  %v1106 = vpop.permute.xlu0 %1105
  %1107 = vrot.lane.b32.xlu0 %v1104, 127
  %v1108 = vpop.permute.xlu0 %1107
  %v1109 = vsel %vm63, %v1106, %v1108
  %s1112 = scalar_lea.vmem [#allocation1], 1
  %1113 = vst [vmem:[%s1112] ss:$2 sm:$0xff] %v984
  %v1114 = vld.sshfl [vmem:[#allocation1] sm:$0xff pattern:$0x75316420]
  %v1115 = vld.sshfl [vmem:[#allocation1 + $0x8] sm:$0xff pattern:$0x75316420]
  %1116 = vrot.lane.b32.xlu0 %v1114, 126
  %v1117 = vpop.permute.xlu0 %1116
  %1118 = vrot.lane.b32.xlu0 %v1115, 126
  %v1119 = vpop.permute.xlu0 %1118
  %v1120 = vsel %vm74, %v1117, %v1119
  %1123 = vst [vmem:[#allocation1] ss:$2 sm:$0xff] %v984
  %v1124 = vld.sshfl [vmem:[#allocation1] sm:$0xff pattern:$0x75316420]
  %v1125 = vld.sshfl [vmem:[#allocation1 + $0x8] sm:$0xff pattern:$0x75316420]
  %1126 = vrot.lane.b32.xlu0 %v1124, 112
  %v1127 = vpop.permute.xlu0 %1126
  %1128 = vrot.lane.b32.xlu0 %v1125, 112
  %v1129 = vpop.permute.xlu0 %1128
  %v1130 = vsel %vm86, %v1127, %v1129
  %s1133 = scalar_lea.vmem [#allocation1], 1
  %1134 = vst [vmem:[%s1133] ss:$2 sm:$0xff] %v984
  %v1135 = vld.sshfl [vmem:[#allocation1] sm:$0xff pattern:$0x75316420]
  %v1136 = vld.sshfl [vmem:[#allocation1 + $0x8] sm:$0xff pattern:$0x75316420]
  %1137 = vrot.lane.b32.xlu0 %v1135, 111
  %v1138 = vpop.permute.xlu0 %1137
  %1139 = vrot.lane.b32.xlu0 %v1136, 111
  %v1140 = vpop.permute.xlu0 %1139
  %v1141 = vsel %vm97, %v1138, %v1140
  %1144 = vst [vmem:[#allocation1] ss:$2 sm:$0xff] %v984
  %v1145 = vld.sshfl [vmem:[#allocation1] sm:$0xff pattern:$0x75316420]
  %v1146 = vld.sshfl [vmem:[#allocation1 + $0x8] sm:$0xff pattern:$0x75316420]
  %1147 = vrot.lane.b32.xlu0 %v1145, 110
  %v1148 = vpop.permute.xlu0 %1147
  %1149 = vrot.lane.b32.xlu0 %v1146, 110
  %v1150 = vpop.permute.xlu0 %1149
  %v1151 = vsel %vm109, %v1148, %v1150
  %s1154 = scalar_lea.vmem [#allocation1], 1
  %1155 = vst [vmem:[%s1154] ss:$2 sm:$0xff] %v984
  %v1156 = vld.sshfl [vmem:[#allocation1] sm:$0xff pattern:$0x75316420]
  %v1157 = vld.sshfl [vmem:[#allocation1 + $0x8] sm:$0xff pattern:$0x75316420]
  %1158 = vrot.lane.b32.xlu0 %v1156, 96
  %v1159 = vpop.permute.xlu0 %1158
  %1160 = vrot.lane.b32.xlu0 %v1157, 96
  %v1161 = vpop.permute.xlu0 %1160
  %v1162 = vsel %vm120, %v1159, %v1161
  %v1165 = vsel %vm230, %v994, %v1006
  %v1166 = vsel %vm230, %v995, %v1005
  %v1167 = vsel %vm230, %v1016, %v1027
  %v1168 = vsel %vm230, %v1015, %v1026
  %v1169 = vsel %vm230, %v1037, %v1048
  %v1170 = vsel %vm230, %v1036, %v1047
  %v1171 = vsel %vm230, %v1058, %v1075
  %v1172 = vsel %vm230, %v1057, %v1076
  %v1173 = vsel %vm230, %v1091, %v1098
  %v1174 = vsel %vm230, %v1092, %v1099
  %v1175 = vsel %vm230, %v1109, %v1120
  %v1176 = vsel %vm230, %v1108, %v1119
  %v1177 = vsel %vm230, %v1130, %v1141
  %v1178 = vsel %vm230, %v1129, %v1140
  %v1179 = vsel %vm230, %v1151, %v1162
  %v1180 = vsel %vm230, %v1150, %v1161
  %1182 = vst [vmem:[#allocation1] ss:$2 sm:$0xff] %v984
  %s1183 = scalar_lea.vmem [#allocation1], 16
  %1184 = vst [vmem:[%s1183] ss:$2 sm:$0xff] %v985
  %v1185 = vld.sshfl [vmem:[#allocation1] sm:$0xff pattern:$0x75316420]
  %v1186 = vld.sshfl [vmem:[#allocation1 + $0x8] sm:$0xff pattern:$0x75316420]
  %v1187 = vld.sshfl [vmem:[#allocation1 + $0x10] sm:$0xff pattern:$0x75316420]
  %s1191 = scalar_lea.vmem [#allocation1], 1
  %1192 = vst [vmem:[%s1191] ss:$2 sm:$0xff] %v984
  %s1193 = scalar_lea.vmem [#allocation1], 17
  %1194 = vst [vmem:[%s1193] ss:$2 sm:$0xff] %v985
  %v1195 = vld.sshfl [vmem:[#allocation1] sm:$0xff pattern:$0x75316420]
  %v1196 = vld.sshfl [vmem:[#allocation1 + $0x8] sm:$0xff pattern:$0x75316420]
  %v1197 = vld.sshfl [vmem:[#allocation1 + $0x10] sm:$0xff pattern:$0x75316420]
  %1198 = vrot.lane.b32.xlu0 %v1195, 127
  %v1199 = vpop.permute.xlu0 %1198
  %1200 = vrot.lane.b32.xlu0 %v1196, 127
  %v1201 = vpop.permute.xlu0 %1200
  %1202 = vrot.lane.b32.xlu0 %v1197, 127
  %v1203 = vpop.permute.xlu0 %1202
  %v1204 = vsel %vm63, %v1199, %v1201
  %v1205 = vsel %vm63, %v1201, %v1203
  %v1209 = vsel %vm230, %v1185, %v1204
  %v1210 = vsel %vm230, %v1186, %v1205
  %v1211 = vsel %vm230, %v1187, %v1203
  %1215 = vrot.lane.b32.xlu0 %v1209, 95
  %v1216 = vpop.permute.xlu0 %1215
  %1217 = vrot.lane.b32.xlu0 %v1210, 95
  %v1218 = vpop.permute.xlu0 %1217
  %1219 = vrot.lane.b32.xlu0 %v1211, 95
  %v1220 = vpop.permute.xlu0 %1219
  %v1221 = vsel %vm138, %v1216, %v1218
  %v1222 = vsel %vm138, %v1218, %v1220
  %1225 = vmatpush.msra.mxu0 0.0
  %1226 = vmatpush.msra.mxu0 0.0
  %1227 = vmatpush.msra.mxu0 0.0
  %1228 = vmatpush.msra.mxu0 0.0
  %1229 = vmatpush.msra.mxu0 0.0
  %1230 = vmatpush.msra.mxu0 0.0
  %1231 = vmatpush.msra.mxu0 0.0
  %1232 = vmatpush.msra.mxu0 %v1221
  %1233 = vmatpush.msra.mxu0 %v1179
  %1234 = vmatpush.msra.mxu0 %v1177
  %1235 = vmatpush.msra.mxu0 %v1175
  %1236 = vmatpush.msra.mxu0 %v1173
  %1237 = vmatpush.msra.mxu0 %v1171
  %1238 = vmatpush.msra.mxu0 %v1169
  %1239 = vmatpush.msra.mxu0 %v1167
  %1240 = vmatpush.msra.mxu0 %v1165
  %1241 = vmatmul.f32.gmra.mxu0 %v293
  %v1242 = vpop.f32.mrf.mxu0
  %v1243 = vadd.f32 0.0, %v1242
  %1244 = vmatmul.f32.gmra.mxu0 %v296
  %v1245 = vpop.f32.mrf.mxu0
  %v1246 = vadd.f32 0.0, %v1245
  %1247 = vdwg.mxu0
  %1248 = vmatpush.msra.mxu0 0.0
  %1249 = vmatpush.msra.mxu0 0.0
  %1250 = vmatpush.msra.mxu0 0.0
  %1251 = vmatpush.msra.mxu0 0.0
  %1252 = vmatpush.msra.mxu0 0.0
  %1253 = vmatpush.msra.mxu0 0.0
  %1254 = vmatpush.msra.mxu0 0.0
  %1255 = vmatpush.msra.mxu0 %v1222
  %1256 = vmatpush.msra.mxu0 %v1180
  %1257 = vmatpush.msra.mxu0 %v1178
  %1258 = vmatpush.msra.mxu0 %v1176
  %1259 = vmatpush.msra.mxu0 %v1174
  %1260 = vmatpush.msra.mxu0 %v1172
  %1261 = vmatpush.msra.mxu0 %v1170
  %1262 = vmatpush.msra.mxu0 %v1168
  %1263 = vmatpush.msra.mxu0 %v1166
  %1264 = vmatmul.f32.gmra.mxu0 %v293
  %v1265 = vpop.f32.mrf.mxu0
  %v1266 = vadd.f32 0.0, %v1265
  %1267 = vmatmul.f32.gmra.mxu0 %v296
  %v1268 = vpop.f32.mrf.mxu0
  %v1269 = vadd.f32 0.0, %v1268
  %1270 = vdwg.mxu0
  %v1271 = vmul.f32 %v1243, 1.442695
  %v1272 = vpow.pop %v1271
  %v1273 = vmul.f32 %v1266, 1.442695
  %v1274 = vpow.pop %v1273
  %v1275 = vand.u32 2147483647, %v1246
  %vm1276 = vcmp.le.f32.partialorder %v1275, 0.7853982
  %vm1277 = vcmp.lt.s32.totalorder %v1246, 0
  %v1278 = vand.u32 %v1246, 2139095040
  %v1279 = vshrl.u32 %v1278, 23
  %v1280 = vsub.s32 %v1279, 127
  %v1281 = vand.u32 2147483647, %v1246
  %v1282 = vand.u32 %v1281, 8388607
  %v1283 = vor.u32 %v1282, 8388608
  %v1284 = vsub.s32 0, %v1283
  %v1285 = vadd.s32 %v1280, 1
  %vm1286 = vcmp.gt.s32.totalorder %v1285, 0
  %v1287 = vsel %vm1286, %v1285, 0
  %v1288 = vshrl.u32 %v1287, 5
  %v1289 = vand.u32 %v1287, 31
  %v1290 = vsub.s32 32, %v1289
  %v1291 = vshrl.u32 683565275, %v1290
  %v1292 = vshll.u32 683565275, %v1289
  %v1293 = vshrl.u32 2475754826, %v1290
  %v1294 = vor.u32 %v1292, %v1293
  %v1295 = vshll.u32 2475754826, %v1289
  %v1296 = vshrl.u32 2131351028, %v1290
  %v1297 = vor.u32 %v1295, %v1296
  %v1298 = vshll.u32 2131351028, %v1289
  %v1299 = vshrl.u32 2102212464, %v1290
  %v1300 = vor.u32 %v1298, %v1299
  %v1301 = vshll.u32 2102212464, %v1289
  %v1302 = vshrl.u32 920167782, %v1290
  %v1303 = vor.u32 %v1301, %v1302
  %v1304 = vshll.u32 920167782, %v1289
  %v1305 = vshrl.u32 1326507024, %v1290
  %v1306 = vor.u32 %v1304, %v1305
  %vm1307 = vcmp.lt.s32.totalorder %v1288, 1
  %vm1308 = vcmp.lt.s32.totalorder %v1288, 2
  %vm1309 = vcmp.lt.s32.totalorder %v1288, 3
  %vm1310 = vcmp.lt.s32.totalorder %v1288, 4
  %v1311 = vsel %vm1307, %v1291, %v1294
  %v1312 = vsel %vm1310, %v1300, 2102212464
  %v1313 = vsel %vm1309, %v1297, %v1312
  %v1314 = vsel %vm1308, %v1311, %v1313
  %v1315 = vsel %vm1307, %v1294, %v1297
  %v1316 = vsel %vm1310, %v1303, 920167782
  %v1317 = vsel %vm1309, %v1300, %v1316
  %v1318 = vsel %vm1308, %v1315, %v1317
  %v1319 = vsel %vm1307, %v1297, %v1300
  %v1320 = vsel %vm1310, %v1306, 1326507024
  %v1321 = vsel %vm1309, %v1303, %v1320
  %v1322 = vsel %vm1308, %v1319, %v1321
  %v1323 = vshll.u32 %v1283, 8
  %v1324 = vand.u32 %v1323, 65535
  %v1325 = vshrl.u32 %v1323, 16
  %v1326 = vand.u32 %v1322, 65535
  %v1327 = vshrl.u32 %v1322, 16
  %v1328 = vmul.u32 %v1324, %v1326
  %v1329 = vmul.u32 %v1324, %v1327
  %v1330 = vmul.u32 %v1325, %v1326
  %v1331 = vmul.u32 %v1325, %v1327
  %v1332 = vshll.u32 %v1329, 16
  %v1333 = vshrl.u32 %v1329, 16
  %v1334 = vshll.u32 %v1330, 16
  %v1335 = vshrl.u32 %v1330, 16
  %vm1336 = vc.u32 %v1328, %v1332
  %v1337 = vsel %vm1336, 1, 0
  %v1338 = vadd.s32 %v1328, %v1332
  %v1339 = vadd.s32 %v1331, %v1337
  %vm1340 = vc.u32 %v1338, %v1334
  %v1341 = vsel %vm1340, 1, 0
  %v1342 = vadd.s32 %v1338, %v1334
  %v1343 = vadd.s32 %v1339, %v1341
  %v1344 = vadd.s32 %v1343, %v1333
  %v1345 = vadd.s32 %v1344, %v1335
  %v1346 = vand.u32 %v1323, 65535
  %v1347 = vshrl.u32 %v1323, 16
  %v1348 = vand.u32 %v1318, 65535
  %v1349 = vshrl.u32 %v1318, 16
  %v1350 = vmul.u32 %v1346, %v1348
  %v1351 = vmul.u32 %v1346, %v1349
  %v1352 = vmul.u32 %v1347, %v1348
  %v1353 = vmul.u32 %v1347, %v1349
  %v1354 = vshll.u32 %v1351, 16
  %v1355 = vshrl.u32 %v1351, 16
  %v1356 = vshll.u32 %v1352, 16
  %v1357 = vshrl.u32 %v1352, 16
  %vm1358 = vc.u32 %v1350, %v1354
  %v1359 = vsel %vm1358, 1, 0
  %v1360 = vadd.s32 %v1350, %v1354
  %v1361 = vadd.s32 %v1353, %v1359
  %vm1362 = vc.u32 %v1360, %v1356
  %v1363 = vsel %vm1362, 1, 0
  %v1364 = vadd.s32 %v1360, %v1356
  %v1365 = vadd.s32 %v1361, %v1363
  %v1366 = vadd.s32 %v1365, %v1355
  %v1367 = vadd.s32 %v1366, %v1357
  %v1368 = vmul.u32 %v1323, %v1314
  %v1369 = vadd.s32 %v1345, %v1364
  %vm1370 = vc.u32 %v1345, %v1364
  %v1371 = vadd.s32 %v1367, 1
  %v1372 = vsel %vm1370, %v1371, %v1367
  %v1373 = vadd.s32 %v1368, %v1372
  %v1374 = vadd.s32 %v1373, 536870912
  %v1375 = vshrl.u32 %v1374, 30
  %v1376 = vshll.u32 %v1375, 30
  %v1377 = vsub.s32 %v1373, %v1376
  %vm1378 = vcmp.lt.s32.totalorder %v1377, 0
  %v1379 = vsub.s32 0, %v1377
  %v1380 = vsel %vm1378, %v1379, %v1377
  %v1381 = vclz %v1380
  %v1382 = vsub.s32 %v1381, 2
  %vm1383 = vcmp.gt.s32.totalorder 0, %v1382
  %v1384 = vsel %vm1383, 0, %v1382
  %v1385 = vsub.s32 32, %v1384
  %v1386 = vshll.u32 %v1377, %v1384
  %v1387 = vshrl.u32 %v1369, %v1385
  %v1388 = vor.u32 %v1386, %v1387
  %v1389 = vsub.s32 4294967266, %v1384
  %v1390 = vadd.s32 %v1389, 127
  %v1391 = vshll.u32 %v1390, 23
  %v1392 = vor.u32 4788187, %v1391
  %v1393 = vand.u32 2147483647, %v1392
  %v1395 = vcvt.s32.f32 %v1388
  %v1396 = vmul.f32 %v1395, %v1393
  %v1397 = vxor.u32 %v1396, 2147483648
  %v1398 = vsel %vm1277, %v1397, %v1396
  %v1399 = vsub.s32 4, %v1375
  %v1400 = vsel %vm1277, %v1399, %v1375
  %v1401 = vsel %vm1276, %v1246, %v1398
  %v1402 = vsel %vm1276, 0, %v1400
  %v1403 = vmul.f32 %v1401, %v1401
  %v1404 = vmul.f32 %v1403, -0.001358992
  %v1405 = vadd.f32 %v1404, 0.041655596
  %v1406 = vmul.f32 %v1403, %v1405
  %v1407 = vadd.f32 %v1406, -0.4999988
  %v1408 = vmul.f32 %v1403, %v1407
  %v1409 = vadd.f32 1.0, %v1408
  %v1410 = vmul.f32 %v1401, %v1401
  %v1411 = vmul.f32 %v1410, -0.00019511016
  %v1412 = vadd.f32 %v1411, 0.008332121
  %v1413 = vmul.f32 %v1410, %v1412
  %v1414 = vadd.f32 %v1413, -0.16666654
  %v1415 = vmul.f32 %v1410, %v1414
  %v1416 = vadd.f32 %v1415, 1.0
  %v1417 = vmul.f32 %v1416, %v1401
  %vm1418 = vweird.f32 %v1246
  %v1419 = vand.u32 %v1402, 3
  %vm1420 = vcmp.lt.s32.totalorder %v1419, 2
  %vm1421 = vcmp.eq.s32.totalorder %v1419, 0
  %v1422 = vxor.u32 %v1417, 2147483648
  %v1423 = vsel %vm1421, %v1409, %v1422
  %vm1424 = vcmp.eq.s32.totalorder %v1419, 2
  %v1425 = vxor.u32 %v1409, 2147483648
  %v1426 = vsel %vm1424, %v1425, %v1417
  %v1427 = vsel %vm1420, %v1423, %v1426
  %v1428 = vsel %vm1418, nan, %v1427
  %v1429 = vand.u32 2147483647, %v1269
  %vm1430 = vcmp.le.f32.partialorder %v1429, 0.7853982
  %vm1431 = vcmp.lt.s32.totalorder %v1269, 0
  %v1432 = vand.u32 %v1269, 2139095040
  %v1433 = vshrl.u32 %v1432, 23
  %v1434 = vsub.s32 %v1433, 127
  %v1435 = vand.u32 2147483647, %v1269
  %v1436 = vand.u32 %v1435, 8388607
  %v1437 = vor.u32 %v1436, 8388608
  %v1438 = vsub.s32 0, %v1437
  %v1439 = vadd.s32 %v1434, 1
  %vm1440 = vcmp.gt.s32.totalorder %v1439, 0
  %v1441 = vsel %vm1440, %v1439, 0
  %v1442 = vshrl.u32 %v1441, 5
  %v1443 = vand.u32 %v1441, 31
  %v1444 = vsub.s32 32, %v1443
  %v1445 = vshrl.u32 683565275, %v1444
  %v1446 = vshll.u32 683565275, %v1443
  %v1447 = vshrl.u32 2475754826, %v1444
  %v1448 = vor.u32 %v1446, %v1447
  %v1449 = vshll.u32 2475754826, %v1443
  %v1450 = vshrl.u32 2131351028, %v1444
  %v1451 = vor.u32 %v1449, %v1450
  %v1452 = vshll.u32 2131351028, %v1443
  %v1453 = vshrl.u32 2102212464, %v1444
  %v1454 = vor.u32 %v1452, %v1453
  %v1455 = vshll.u32 2102212464, %v1443
  %v1456 = vshrl.u32 920167782, %v1444
  %v1457 = vor.u32 %v1455, %v1456
  %v1458 = vshll.u32 920167782, %v1443
  %v1459 = vshrl.u32 1326507024, %v1444
  %v1460 = vor.u32 %v1458, %v1459
  %vm1461 = vcmp.lt.s32.totalorder %v1442, 1
  %vm1462 = vcmp.lt.s32.totalorder %v1442, 2
  %vm1463 = vcmp.lt.s32.totalorder %v1442, 3
  %vm1464 = vcmp.lt.s32.totalorder %v1442, 4
  %v1465 = vsel %vm1461, %v1445, %v1448
  %v1466 = vsel %vm1464, %v1454, 2102212464
  %v1467 = vsel %vm1463, %v1451, %v1466
  %v1468 = vsel %vm1462, %v1465, %v1467
  %v1469 = vsel %vm1461, %v1448, %v1451
  %v1470 = vsel %vm1464, %v1457, 920167782
  %v1471 = vsel %vm1463, %v1454, %v1470
  %v1472 = vsel %vm1462, %v1469, %v1471
  %v1473 = vsel %vm1461, %v1451, %v1454
  %v1474 = vsel %vm1464, %v1460, 1326507024
  %v1475 = vsel %vm1463, %v1457, %v1474
  %v1476 = vsel %vm1462, %v1473, %v1475
  %v1477 = vshll.u32 %v1437, 8
  %v1478 = vand.u32 %v1477, 65535
  %v1479 = vshrl.u32 %v1477, 16
  %v1480 = vand.u32 %v1476, 65535
  %v1481 = vshrl.u32 %v1476, 16
  %v1482 = vmul.u32 %v1478, %v1480
  %v1483 = vmul.u32 %v1478, %v1481
  %v1484 = vmul.u32 %v1479, %v1480
  %v1485 = vmul.u32 %v1479, %v1481
  %v1486 = vshll.u32 %v1483, 16
  %v1487 = vshrl.u32 %v1483, 16
  %v1488 = vshll.u32 %v1484, 16
  %v1489 = vshrl.u32 %v1484, 16
  %vm1490 = vc.u32 %v1482, %v1486
  %v1491 = vsel %vm1490, 1, 0
  %v1492 = vadd.s32 %v1482, %v1486
  %v1493 = vadd.s32 %v1485, %v1491
  %vm1494 = vc.u32 %v1492, %v1488
  %v1495 = vsel %vm1494, 1, 0
  %v1496 = vadd.s32 %v1492, %v1488
  %v1497 = vadd.s32 %v1493, %v1495
  %v1498 = vadd.s32 %v1497, %v1487
  %v1499 = vadd.s32 %v1498, %v1489
  %v1500 = vand.u32 %v1477, 65535
  %v1501 = vshrl.u32 %v1477, 16
  %v1502 = vand.u32 %v1472, 65535
  %v1503 = vshrl.u32 %v1472, 16
  %v1504 = vmul.u32 %v1500, %v1502
  %v1505 = vmul.u32 %v1500, %v1503
  %v1506 = vmul.u32 %v1501, %v1502
  %v1507 = vmul.u32 %v1501, %v1503
  %v1508 = vshll.u32 %v1505, 16
  %v1509 = vshrl.u32 %v1505, 16
  %v1510 = vshll.u32 %v1506, 16
  %v1511 = vshrl.u32 %v1506, 16
  %vm1512 = vc.u32 %v1504, %v1508
  %v1513 = vsel %vm1512, 1, 0
  %v1514 = vadd.s32 %v1504, %v1508
  %v1515 = vadd.s32 %v1507, %v1513
  %vm1516 = vc.u32 %v1514, %v1510
  %v1517 = vsel %vm1516, 1, 0
  %v1518 = vadd.s32 %v1514, %v1510
  %v1519 = vadd.s32 %v1515, %v1517
  %v1520 = vadd.s32 %v1519, %v1509
  %v1521 = vadd.s32 %v1520, %v1511
  %v1522 = vmul.u32 %v1477, %v1468
  %v1523 = vadd.s32 %v1499, %v1518
  %vm1524 = vc.u32 %v1499, %v1518
  %v1525 = vadd.s32 %v1521, 1
  %v1526 = vsel %vm1524, %v1525, %v1521
  %v1527 = vadd.s32 %v1522, %v1526
  %v1528 = vadd.s32 %v1527, 536870912
  %v1529 = vshrl.u32 %v1528, 30
  %v1530 = vshll.u32 %v1529, 30
  %v1531 = vsub.s32 %v1527, %v1530
  %vm1532 = vcmp.lt.s32.totalorder %v1531, 0
  %v1533 = vsub.s32 0, %v1531
  %v1534 = vsel %vm1532, %v1533, %v1531
  %v1535 = vclz %v1534
  %v1536 = vsub.s32 %v1535, 2
  %vm1537 = vcmp.gt.s32.totalorder 0, %v1536
  %v1538 = vsel %vm1537, 0, %v1536
  %v1539 = vsub.s32 32, %v1538
  %v1540 = vshll.u32 %v1531, %v1538
  %v1541 = vshrl.u32 %v1523, %v1539
  %v1542 = vor.u32 %v1540, %v1541
  %v1543 = vsub.s32 4294967266, %v1538
  %v1544 = vadd.s32 %v1543, 127
  %v1545 = vshll.u32 %v1544, 23
  %v1546 = vor.u32 4788187, %v1545
  %v1547 = vand.u32 2147483647, %v1546
  %v1549 = vcvt.s32.f32 %v1542
  %v1550 = vmul.f32 %v1549, %v1547
  %v1551 = vxor.u32 %v1550, 2147483648
  %v1552 = vsel %vm1431, %v1551, %v1550
  %v1553 = vsub.s32 4, %v1529
  %v1554 = vsel %vm1431, %v1553, %v1529
  %v1555 = vsel %vm1430, %v1269, %v1552
  %v1556 = vsel %vm1430, 0, %v1554
  %v1557 = vmul.f32 %v1555, %v1555
  %v1558 = vmul.f32 %v1557, -0.001358992
  %v1559 = vadd.f32 %v1558, 0.041655596
  %v1560 = vmul.f32 %v1557, %v1559
  %v1561 = vadd.f32 %v1560, -0.4999988
  %v1562 = vmul.f32 %v1557, %v1561
  %v1563 = vadd.f32 1.0, %v1562
  %v1564 = vmul.f32 %v1555, %v1555
  %v1565 = vmul.f32 %v1564, -0.00019511016
  %v1566 = vadd.f32 %v1565, 0.008332121
  %v1567 = vmul.f32 %v1564, %v1566
  %v1568 = vadd.f32 %v1567, -0.16666654
  %v1569 = vmul.f32 %v1564, %v1568
  %v1570 = vadd.f32 %v1569, 1.0
  %v1571 = vmul.f32 %v1570, %v1555
  %vm1572 = vweird.f32 %v1269
  %v1573 = vand.u32 %v1556, 3
  %vm1574 = vcmp.lt.s32.totalorder %v1573, 2
  %vm1575 = vcmp.eq.s32.totalorder %v1573, 0
  %v1576 = vxor.u32 %v1571, 2147483648
  %v1577 = vsel %vm1575, %v1563, %v1576
  %vm1578 = vcmp.eq.s32.totalorder %v1573, 2
  %v1579 = vxor.u32 %v1563, 2147483648
  %v1580 = vsel %vm1578, %v1579, %v1571
  %v1581 = vsel %vm1574, %v1577, %v1580
  %v1582 = vsel %vm1572, nan, %v1581
  %v1583 = vmul.f32 %v1272, %v1428
  %v1584 = vmul.f32 %v1274, %v1582
  %s1585 = scalar_lea.vmem %s6, 16
  %1586 = vst [vmem:[%s1585] sm:$0xff] %v1583
  %1587 = vst.msk [vmem:[%s1585 + $0x8] sm:$0xff] %vm120, %v1584
  %v1588 = vand.u32 2147483647, %v1246
  %vm1589 = vcmp.le.f32.partialorder %v1588, 0.7853982
  %vm1590 = vcmp.lt.s32.totalorder %v1246, 0
  %v1591 = vand.u32 %v1246, 2139095040
  %v1592 = vshrl.u32 %v1591, 23
  %v1593 = vsub.s32 %v1592, 127
  %v1594 = vand.u32 2147483647, %v1246
  %v1595 = vand.u32 %v1594, 8388607
  %v1596 = vor.u32 %v1595, 8388608
  %v1597 = vsub.s32 0, %v1596
  %v1598 = vadd.s32 %v1593, 1
  %vm1599 = vcmp.gt.s32.totalorder %v1598, 0
  %v1600 = vsel %vm1599, %v1598, 0
  %v1601 = vshrl.u32 %v1600, 5
  %v1602 = vand.u32 %v1600, 31
  %v1603 = vsub.s32 32, %v1602
  %v1604 = vshrl.u32 683565275, %v1603
  %v1605 = vshll.u32 683565275, %v1602
  %v1606 = vshrl.u32 2475754826, %v1603
  %v1607 = vor.u32 %v1605, %v1606
  %v1608 = vshll.u32 2475754826, %v1602
  %v1609 = vshrl.u32 2131351028, %v1603
  %v1610 = vor.u32 %v1608, %v1609
  %v1611 = vshll.u32 2131351028, %v1602
  %v1612 = vshrl.u32 2102212464, %v1603
  %v1613 = vor.u32 %v1611, %v1612
  %v1614 = vshll.u32 2102212464, %v1602
  %v1615 = vshrl.u32 920167782, %v1603
  %v1616 = vor.u32 %v1614, %v1615
  %v1617 = vshll.u32 920167782, %v1602
  %v1618 = vshrl.u32 1326507024, %v1603
  %v1619 = vor.u32 %v1617, %v1618
  %vm1620 = vcmp.lt.s32.totalorder %v1601, 1
  %vm1621 = vcmp.lt.s32.totalorder %v1601, 2
  %vm1622 = vcmp.lt.s32.totalorder %v1601, 3
  %vm1623 = vcmp.lt.s32.totalorder %v1601, 4
  %v1624 = vsel %vm1620, %v1604, %v1607
  %v1625 = vsel %vm1623, %v1613, 2102212464
  %v1626 = vsel %vm1622, %v1610, %v1625
  %v1627 = vsel %vm1621, %v1624, %v1626
  %v1628 = vsel %vm1620, %v1607, %v1610
  %v1629 = vsel %vm1623, %v1616, 920167782
  %v1630 = vsel %vm1622, %v1613, %v1629
  %v1631 = vsel %vm1621, %v1628, %v1630
  %v1632 = vsel %vm1620, %v1610, %v1613
  %v1633 = vsel %vm1623, %v1619, 1326507024
  %v1634 = vsel %vm1622, %v1616, %v1633
  %v1635 = vsel %vm1621, %v1632, %v1634
  %v1636 = vshll.u32 %v1596, 8
  %v1637 = vand.u32 %v1636, 65535
  %v1638 = vshrl.u32 %v1636, 16
  %v1639 = vand.u32 %v1635, 65535
  %v1640 = vshrl.u32 %v1635, 16
  %v1641 = vmul.u32 %v1637, %v1639
  %v1642 = vmul.u32 %v1637, %v1640
  %v1643 = vmul.u32 %v1638, %v1639
  %v1644 = vmul.u32 %v1638, %v1640
  %v1645 = vshll.u32 %v1642, 16
  %v1646 = vshrl.u32 %v1642, 16
  %v1647 = vshll.u32 %v1643, 16
  %v1648 = vshrl.u32 %v1643, 16
  %vm1649 = vc.u32 %v1641, %v1645
  %v1650 = vsel %vm1649, 1, 0
  %v1651 = vadd.s32 %v1641, %v1645
  %v1652 = vadd.s32 %v1644, %v1650
  %vm1653 = vc.u32 %v1651, %v1647
  %v1654 = vsel %vm1653, 1, 0
  %v1655 = vadd.s32 %v1651, %v1647
  %v1656 = vadd.s32 %v1652, %v1654
  %v1657 = vadd.s32 %v1656, %v1646
  %v1658 = vadd.s32 %v1657, %v1648
  %v1659 = vand.u32 %v1636, 65535
  %v1660 = vshrl.u32 %v1636, 16
  %v1661 = vand.u32 %v1631, 65535
  %v1662 = vshrl.u32 %v1631, 16
  %v1663 = vmul.u32 %v1659, %v1661
  %v1664 = vmul.u32 %v1659, %v1662
  %v1665 = vmul.u32 %v1660, %v1661
  %v1666 = vmul.u32 %v1660, %v1662
  %v1667 = vshll.u32 %v1664, 16
  %v1668 = vshrl.u32 %v1664, 16
  %v1669 = vshll.u32 %v1665, 16
  %v1670 = vshrl.u32 %v1665, 16
  %vm1671 = vc.u32 %v1663, %v1667
  %v1672 = vsel %vm1671, 1, 0
  %v1673 = vadd.s32 %v1663, %v1667
  %v1674 = vadd.s32 %v1666, %v1672
  %vm1675 = vc.u32 %v1673, %v1669
  %v1676 = vsel %vm1675, 1, 0
  %v1677 = vadd.s32 %v1673, %v1669
  %v1678 = vadd.s32 %v1674, %v1676
  %v1679 = vadd.s32 %v1678, %v1668
  %v1680 = vadd.s32 %v1679, %v1670
  %v1681 = vmul.u32 %v1636, %v1627
  %v1682 = vadd.s32 %v1658, %v1677
  %vm1683 = vc.u32 %v1658, %v1677
  %v1684 = vadd.s32 %v1680, 1
  %v1685 = vsel %vm1683, %v1684, %v1680
  %v1686 = vadd.s32 %v1681, %v1685
  %v1687 = vadd.s32 %v1686, 536870912
  %v1688 = vshrl.u32 %v1687, 30
  %v1689 = vshll.u32 %v1688, 30
  %v1690 = vsub.s32 %v1686, %v1689
  %vm1691 = vcmp.lt.s32.totalorder %v1690, 0
  %v1692 = vsub.s32 0, %v1690
  %v1693 = vsel %vm1691, %v1692, %v1690
  %v1694 = vclz %v1693
  %v1695 = vsub.s32 %v1694, 2
  %vm1696 = vcmp.gt.s32.totalorder 0, %v1695
  %v1697 = vsel %vm1696, 0, %v1695
  %v1698 = vsub.s32 32, %v1697
  %v1699 = vshll.u32 %v1690, %v1697
  %v1700 = vshrl.u32 %v1682, %v1698
  %v1701 = vor.u32 %v1699, %v1700
  %v1702 = vsub.s32 4294967266, %v1697
  %v1703 = vadd.s32 %v1702, 127
  %v1704 = vshll.u32 %v1703, 23
  %v1705 = vor.u32 4788187, %v1704
  %v1706 = vand.u32 2147483647, %v1705
  %v1708 = vcvt.s32.f32 %v1701
  %v1709 = vmul.f32 %v1708, %v1706
  %v1710 = vxor.u32 %v1709, 2147483648
  %v1711 = vsel %vm1590, %v1710, %v1709
  %v1712 = vsub.s32 4, %v1688
  %v1713 = vsel %vm1590, %v1712, %v1688
  %v1714 = vsel %vm1589, %v1246, %v1711
  %v1715 = vsel %vm1589, 0, %v1713
  %v1716 = vmul.f32 %v1714, %v1714
  %v1717 = vmul.f32 %v1716, -0.001358992
  %v1718 = vadd.f32 %v1717, 0.041655596
  %v1719 = vmul.f32 %v1716, %v1718
  %v1720 = vadd.f32 %v1719, -0.4999988
  %v1721 = vmul.f32 %v1716, %v1720
  %v1722 = vadd.f32 1.0, %v1721
  %v1723 = vmul.f32 %v1714, %v1714
  %v1724 = vmul.f32 %v1723, -0.00019511016
  %v1725 = vadd.f32 %v1724, 0.008332121
  %v1726 = vmul.f32 %v1723, %v1725
  %v1727 = vadd.f32 %v1726, -0.16666654
  %v1728 = vmul.f32 %v1723, %v1727
  %v1729 = vadd.f32 %v1728, 1.0
  %v1730 = vmul.f32 %v1729, %v1714
  %vm1731 = vweird.f32 %v1246
  %v1732 = vadd.s32 %v1715, 3
  %v1733 = vand.u32 %v1732, 3
  %vm1734 = vcmp.lt.s32.totalorder %v1733, 2
  %vm1735 = vcmp.eq.s32.totalorder %v1733, 0
  %v1736 = vxor.u32 %v1730, 2147483648
  %v1737 = vsel %vm1735, %v1722, %v1736
  %vm1738 = vcmp.eq.s32.totalorder %v1733, 2
  %v1739 = vxor.u32 %v1722, 2147483648
  %v1740 = vsel %vm1738, %v1739, %v1730
  %v1741 = vsel %vm1734, %v1737, %v1740
  %v1742 = vsel %vm1731, nan, %v1741
  %v1743 = vand.u32 2147483647, %v1269
  %vm1744 = vcmp.le.f32.partialorder %v1743, 0.7853982
  %vm1745 = vcmp.lt.s32.totalorder %v1269, 0
  %v1746 = vand.u32 %v1269, 2139095040
  %v1747 = vshrl.u32 %v1746, 23
  %v1748 = vsub.s32 %v1747, 127
  %v1749 = vand.u32 2147483647, %v1269
  %v1750 = vand.u32 %v1749, 8388607
  %v1751 = vor.u32 %v1750, 8388608
  %v1752 = vsub.s32 0, %v1751
  %v1753 = vadd.s32 %v1748, 1
  %vm1754 = vcmp.gt.s32.totalorder %v1753, 0
  %v1755 = vsel %vm1754, %v1753, 0
  %v1756 = vshrl.u32 %v1755, 5
  %v1757 = vand.u32 %v1755, 31
  %v1758 = vsub.s32 32, %v1757
  %v1759 = vshrl.u32 683565275, %v1758
  %v1760 = vshll.u32 683565275, %v1757
  %v1761 = vshrl.u32 2475754826, %v1758
  %v1762 = vor.u32 %v1760, %v1761
  %v1763 = vshll.u32 2475754826, %v1757
  %v1764 = vshrl.u32 2131351028, %v1758
  %v1765 = vor.u32 %v1763, %v1764
  %v1766 = vshll.u32 2131351028, %v1757
  %v1767 = vshrl.u32 2102212464, %v1758
  %v1768 = vor.u32 %v1766, %v1767
  %v1769 = vshll.u32 2102212464, %v1757
  %v1770 = vshrl.u32 920167782, %v1758
  %v1771 = vor.u32 %v1769, %v1770
  %v1772 = vshll.u32 920167782, %v1757
  %v1773 = vshrl.u32 1326507024, %v1758
  %v1774 = vor.u32 %v1772, %v1773
  %vm1775 = vcmp.lt.s32.totalorder %v1756, 1
  %vm1776 = vcmp.lt.s32.totalorder %v1756, 2
  %vm1777 = vcmp.lt.s32.totalorder %v1756, 3
  %vm1778 = vcmp.lt.s32.totalorder %v1756, 4
  %v1779 = vsel %vm1775, %v1759, %v1762
  %v1780 = vsel %vm1778, %v1768, 2102212464
  %v1781 = vsel %vm1777, %v1765, %v1780
  %v1782 = vsel %vm1776, %v1779, %v1781
  %v1783 = vsel %vm1775, %v1762, %v1765
  %v1784 = vsel %vm1778, %v1771, 920167782
  %v1785 = vsel %vm1777, %v1768, %v1784
  %v1786 = vsel %vm1776, %v1783, %v1785
  %v1787 = vsel %vm1775, %v1765, %v1768
  %v1788 = vsel %vm1778, %v1774, 1326507024
  %v1789 = vsel %vm1777, %v1771, %v1788
  %v1790 = vsel %vm1776, %v1787, %v1789
  %v1791 = vshll.u32 %v1751, 8
  %v1792 = vand.u32 %v1791, 65535
  %v1793 = vshrl.u32 %v1791, 16
  %v1794 = vand.u32 %v1790, 65535
  %v1795 = vshrl.u32 %v1790, 16
  %v1796 = vmul.u32 %v1792, %v1794
  %v1797 = vmul.u32 %v1792, %v1795
  %v1798 = vmul.u32 %v1793, %v1794
  %v1799 = vmul.u32 %v1793, %v1795
  %v1800 = vshll.u32 %v1797, 16
  %v1801 = vshrl.u32 %v1797, 16
  %v1802 = vshll.u32 %v1798, 16
  %v1803 = vshrl.u32 %v1798, 16
  %vm1804 = vc.u32 %v1796, %v1800
  %v1805 = vsel %vm1804, 1, 0
  %v1806 = vadd.s32 %v1796, %v1800
  %v1807 = vadd.s32 %v1799, %v1805
  %vm1808 = vc.u32 %v1806, %v1802
  %v1809 = vsel %vm1808, 1, 0
  %v1810 = vadd.s32 %v1806, %v1802
  %v1811 = vadd.s32 %v1807, %v1809
  %v1812 = vadd.s32 %v1811, %v1801
  %v1813 = vadd.s32 %v1812, %v1803
  %v1814 = vand.u32 %v1791, 65535
  %v1815 = vshrl.u32 %v1791, 16
  %v1816 = vand.u32 %v1786, 65535
  %v1817 = vshrl.u32 %v1786, 16
  %v1818 = vmul.u32 %v1814, %v1816
  %v1819 = vmul.u32 %v1814, %v1817
  %v1820 = vmul.u32 %v1815, %v1816
  %v1821 = vmul.u32 %v1815, %v1817
  %v1822 = vshll.u32 %v1819, 16
  %v1823 = vshrl.u32 %v1819, 16
  %v1824 = vshll.u32 %v1820, 16
  %v1825 = vshrl.u32 %v1820, 16
  %vm1826 = vc.u32 %v1818, %v1822
  %v1827 = vsel %vm1826, 1, 0
  %v1828 = vadd.s32 %v1818, %v1822
  %v1829 = vadd.s32 %v1821, %v1827
  %vm1830 = vc.u32 %v1828, %v1824
  %v1831 = vsel %vm1830, 1, 0
  %v1832 = vadd.s32 %v1828, %v1824
  %v1833 = vadd.s32 %v1829, %v1831
  %v1834 = vadd.s32 %v1833, %v1823
  %v1835 = vadd.s32 %v1834, %v1825
  %v1836 = vmul.u32 %v1791, %v1782
  %v1837 = vadd.s32 %v1813, %v1832
  %vm1838 = vc.u32 %v1813, %v1832
  %v1839 = vadd.s32 %v1835, 1
  %v1840 = vsel %vm1838, %v1839, %v1835
  %v1841 = vadd.s32 %v1836, %v1840
  %v1842 = vadd.s32 %v1841, 536870912
  %v1843 = vshrl.u32 %v1842, 30
  %v1844 = vshll.u32 %v1843, 30
  %v1845 = vsub.s32 %v1841, %v1844
  %vm1846 = vcmp.lt.s32.totalorder %v1845, 0
  %v1847 = vsub.s32 0, %v1845
  %v1848 = vsel %vm1846, %v1847, %v1845
  %v1849 = vclz %v1848
  %v1850 = vsub.s32 %v1849, 2
  %vm1851 = vcmp.gt.s32.totalorder 0, %v1850
  %v1852 = vsel %vm1851, 0, %v1850
  %v1853 = vsub.s32 32, %v1852
  %v1854 = vshll.u32 %v1845, %v1852
  %v1855 = vshrl.u32 %v1837, %v1853
  %v1856 = vor.u32 %v1854, %v1855
  %v1857 = vsub.s32 4294967266, %v1852
  %v1858 = vadd.s32 %v1857, 127
  %v1859 = vshll.u32 %v1858, 23
  %v1860 = vor.u32 4788187, %v1859
  %v1861 = vand.u32 2147483647, %v1860
  %v1863 = vcvt.s32.f32 %v1856
  %v1864 = vmul.f32 %v1863, %v1861
  %v1865 = vxor.u32 %v1864, 2147483648
  %v1866 = vsel %vm1745, %v1865, %v1864
  %v1867 = vsub.s32 4, %v1843
  %v1868 = vsel %vm1745, %v1867, %v1843
  %v1869 = vsel %vm1744, %v1269, %v1866
  %v1870 = vsel %vm1744, 0, %v1868
  %v1871 = vmul.f32 %v1869, %v1869
  %v1872 = vmul.f32 %v1871, -0.001358992
  %v1873 = vadd.f32 %v1872, 0.041655596
  %v1874 = vmul.f32 %v1871, %v1873
  %v1875 = vadd.f32 %v1874, -0.4999988
  %v1876 = vmul.f32 %v1871, %v1875
  %v1877 = vadd.f32 1.0, %v1876
  %v1878 = vmul.f32 %v1869, %v1869
  %v1879 = vmul.f32 %v1878, -0.00019511016
  %v1880 = vadd.f32 %v1879, 0.008332121
  %v1881 = vmul.f32 %v1878, %v1880
  %v1882 = vadd.f32 %v1881, -0.16666654
  %v1883 = vmul.f32 %v1878, %v1882
  %v1884 = vadd.f32 %v1883, 1.0
  %v1885 = vmul.f32 %v1884, %v1869
  %vm1886 = vweird.f32 %v1269
  %v1887 = vadd.s32 %v1870, 3
  %v1888 = vand.u32 %v1887, 3
  %vm1889 = vcmp.lt.s32.totalorder %v1888, 2
  %vm1890 = vcmp.eq.s32.totalorder %v1888, 0
  %v1891 = vxor.u32 %v1885, 2147483648
  %v1892 = vsel %vm1890, %v1877, %v1891
  %vm1893 = vcmp.eq.s32.totalorder %v1888, 2
  %v1894 = vxor.u32 %v1877, 2147483648
  %v1895 = vsel %vm1893, %v1894, %v1885
  %v1896 = vsel %vm1889, %v1892, %v1895
  %v1897 = vsel %vm1886, nan, %v1896
  %v1898 = vmul.f32 %v1272, %v1742
  %v1899 = vmul.f32 %v1274, %v1897
  %s1900 = scalar_lea.vmem %s7, 16
  %1901 = vst [vmem:[%s1900] sm:$0xff] %v1898
  %1902 = vst.msk [vmem:[%s1900 + $0x8] sm:$0xff] %vm120, %v1899
  // Predicated region
  $region26: #{wfm_conv2d.1} parent=0 // pred_check
    _
  $region27: #{wfm_conv2d.1} parent=0 // pred_check_branch
    %1904 = sbr.rel (0) target = $region29
  $region28: #{wfm_conv2d.1} parent=0 // pred_region
    _
  $region29: #{wfm_conv2d.1} parent=0 // pred_fallthru
    _
  // Predicated region
  $region30: #{wfm_conv2d.1} parent=0 // pred_check
    _
  $region31: #{wfm_conv2d.1} parent=0 // pred_check_branch
    %1906 = sbr.rel (0) target = $region33
  $region32: #{wfm_conv2d.1} parent=0 // pred_region
    _
  $region33: #{wfm_conv2d.1} parent=0 // pred_fallthru
    _
  // Predicated region
  $region34: #{wfm_conv2d.1} parent=0 // pred_check
    _
  $region35: #{wfm_conv2d.1} parent=0 // pred_check_branch
    %1908 = sbr.rel (0) target = $region37
  $region36: #{wfm_conv2d.1} parent=0 // pred_region
    _
  $region37: #{wfm_conv2d.1} parent=0 // pred_fallthru
    _
  // Predicated region
  $region38: #{wfm_conv2d.1} parent=0 // pred_check
    _
  $region39: #{wfm_conv2d.1} parent=0 // pred_check_branch
    %1910 = sbr.rel (0) target = $region41
  $region40: #{wfm_conv2d.1} parent=0 // pred_region
    _
  $region41: #{wfm_conv2d.1} parent=0 // pred_fallthru
    _

</llo_original>
